<compile_context>
chip_gen: v7x
topology: tpu7x:2x2x1
jax: 0.10.0
libtpu: 0.0.40
codegen_flags: <defaults>
</compile_context>

<pallas_src>
import functools

import jax
import jax.numpy as jnp
from jax.experimental import pallas as pl
from jax.experimental.pallas import tpu as pltpu

N_CLASSES = 200
N_CLASSES_PAD = 256        # lane-dense FC output (2 x 128); sliced back in wrapper
C_IN, C_STEM, C_MID, C_FINAL = 3, 32, 64, 512 * 4


# ----------------------------------------------------------------------------
# Kernel A: stem conv  ->  ReLU(P @ W + beta), tiled over M ("parallel").
# ----------------------------------------------------------------------------
def _stem_kernel(p_ref, w_ref, beta_ref, o_ref):
    acc = jnp.dot(p_ref[...], w_ref[...], preferred_element_type=jnp.float32)
    o_ref[...] = jnp.maximum(acc + beta_ref[...], 0.0)


def stem_conv(p_bf16, w_bf16, beta_f32, *, tm=128):
    """p: [M, K] bf16, w: [K, N] bf16 (gamma pre-folded), beta: [1, N] f32 -> [M, N] f32."""
    M, K = p_bf16.shape
    _, N = w_bf16.shape
    grid_m = pl.cdiv(M, tm)
    m_pad = grid_m * tm
    if m_pad != M:
        p_bf16 = jnp.pad(p_bf16, ((0, m_pad - M), (0, 0)))
    out = pl.pallas_call(
        _stem_kernel,
        out_shape=jax.ShapeDtypeStruct((m_pad, N), jnp.float32),
        grid_spec=pltpu.PrefetchScalarGridSpec(
            num_scalar_prefetch=0,
            grid=(grid_m,),
            in_specs=[
                pl.BlockSpec((tm, K), lambda i: (i, 0)),
                pl.BlockSpec((K, N), lambda i: (0, 0)),
                pl.BlockSpec((1, N), lambda i: (0, 0)),
            ],
            out_specs=pl.BlockSpec((tm, N), lambda i: (i, 0)),
        ),
        compiler_params=pltpu.CompilerParams(
            dimension_semantics=("parallel",)),
    )(p_bf16, w_bf16, beta_f32)
    return out[:M] if m_pad != M else out


# ----------------------------------------------------------------------------
# Kernel B: fused  b1(3x3 s2 conv) + b2(1x1 conv) + AdaptiveAvgPool2d(1) + FC.
# Grid iterates over N-tiles of b2's output channels; `h` stays in VMEM scratch;
# logits accumulate in the resident output block (init with bias at j == 0).
# ----------------------------------------------------------------------------
def _tail_kernel(p_ref, w1_ref, b1_ref, w2_ref, b2_ref, wfc_ref, bfc_ref,
                 fms_ref, logits_ref, h_ref, *, nb, spatial):
    j = pl.program_id(0)

    @pl.when(j == 0)
    def _():
        h = jnp.dot(p_ref[...], w1_ref[...], preferred_element_type=jnp.float32)
        h = jnp.maximum(h + b1_ref[...], 0.0)
        h_ref[...] = h.astype(h_ref.dtype)                 # bf16, reused by all tiles
        logits_ref[...] = jnp.zeros(logits_ref.shape, jnp.float32) + bfc_ref[...]

    # b2 1x1 conv tile: [M1, C_mid] @ [C_mid, TN]  (+bias, ReLU)
    f = jnp.dot(h_ref[...], w2_ref[...], preferred_element_type=jnp.float32)
    f = jnp.maximum(f + b2_ref[...], 0.0)
    fms_ref[...] = f                                       # lane-dense 512-wide store

    # AdaptiveAvgPool2d(1) over the spatial rows of this channel tile (per batch).
    parts = []
    for n in range(nb):                                    # static loop (nb small)
        blk = f[n * spatial:(n + 1) * spatial, :]          # [spatial, TN]
        parts.append(jnp.mean(blk, axis=0, keepdims=True))
    pooled = jnp.concatenate(parts, axis=0).astype(jnp.bfloat16)   # [nb, TN]

    # Partial FC contribution of this channel tile, accumulated into logits.
    logits_ref[...] += jnp.dot(pooled, wfc_ref[...],
                               preferred_element_type=jnp.float32)


def tail_fused(p_b1, w1, b1, w2, b2, wfc, bfc, *, nb, spatial, tn=512):
    M1, K1 = p_b1.shape
    c_mid = w1.shape[1]
    c_out = w2.shape[1]
    n_fc = wfc.shape[1]
    assert c_out % tn == 0
    nt = c_out // tn
    return pl.pallas_call(
        functools.partial(_tail_kernel, nb=nb, spatial=spatial),
        out_shape=(jax.ShapeDtypeStruct((M1, c_out), jnp.float32),
                   jax.ShapeDtypeStruct((nb, n_fc), jnp.float32)),
        grid_spec=pltpu.PrefetchScalarGridSpec(
            num_scalar_prefetch=0,
            grid=(nt,),
            in_specs=[
                pl.BlockSpec((M1, K1), lambda j: (0, 0)),      # b1 im2col patches
                pl.BlockSpec((K1, c_mid), lambda j: (0, 0)),   # b1 weight (gamma folded)
                pl.BlockSpec((1, c_mid), lambda j: (0, 0)),    # b1 beta
                pl.BlockSpec((c_mid, tn), lambda j: (0, j)),   # b2 weight N-tile
                pl.BlockSpec((1, tn), lambda j: (0, j)),       # b2 beta N-tile
                pl.BlockSpec((tn, n_fc), lambda j: (j, 0)),    # fc weight K-tile
                pl.BlockSpec((1, n_fc), lambda j: (0, 0)),     # fc bias
            ],
            out_specs=(
                pl.BlockSpec((M1, tn), lambda j: (0, j)),      # fms tile
                pl.BlockSpec((nb, n_fc), lambda j: (0, 0)),    # logits (accumulator)
            ),
            scratch_shapes=[pltpu.VMEM((M1, c_mid), jnp.bfloat16)],
        ),
        compiler_params=pltpu.CompilerParams(
            dimension_semantics=("arbitrary",)),
    )(p_b1, w1, b1, w2, b2, wfc, bfc)


# ----------------------------------------------------------------------------
# JAX glue: im2col patch extraction (layout plumbing only, no hot-path compute)
# ----------------------------------------------------------------------------
def im2col(x_nhwc, kh, kw, stride, pad):
    """x: [N, H, W, C] -> ([N*Ho*Wo, kh*kw*C], (N, Ho, Wo))."""
    N, H, W, C = x_nhwc.shape
    xp = jnp.pad(x_nhwc, ((0, 0), (pad, pad), (pad, pad), (0, 0)))
    Ho = (H + 2 * pad - kh) // stride + 1
    Wo = (W + 2 * pad - kw) // stride + 1
    patches = []
    for i in range(kh):
        for j in range(kw):
            patches.append(
                xp[:, i:i + stride * Ho:stride, j:j + stride * Wo:stride, :])
    p = jnp.concatenate(patches, axis=-1)      # [N, Ho, Wo, kh*kw*C]
    return p.reshape(N * Ho * Wo, kh * kw * C), (N, Ho, Wo)


# ----------------------------------------------------------------------------
# Model: deterministic synthetic parameters (BN folded + bf16-cast at init)
# ----------------------------------------------------------------------------
def init_params(key):
    ks = jax.random.split(key, 9)

    def w(k, shape, fan_in):
        return jax.random.normal(k, shape, jnp.float32) / jnp.sqrt(fan_in)

    stem_w = w(ks[0], (3, 3, C_IN, C_STEM), 9 * C_IN)
    stem_g = 1.0 + 0.1 * jax.random.normal(ks[1], (1, C_STEM), jnp.float32)
    stem_b = 0.1 * jax.random.normal(ks[2], (1, C_STEM), jnp.float32)
    b1_w = w(ks[3], (3, 3, C_STEM, C_MID), 9 * C_STEM)
    b1_g = 1.0 + 0.1 * jax.random.normal(ks[4], (1, C_MID), jnp.float32)
    b1_b = 0.1 * jax.random.normal(ks[5], (1, C_MID), jnp.float32)
    b2_w = w(ks[6], (1, 1, C_MID, C_FINAL), C_MID)
    b2_g = jnp.ones((1, C_FINAL), jnp.float32)
    b2_b = jnp.zeros((1, C_FINAL), jnp.float32)
    fc_w = w(ks[7], (C_FINAL, N_CLASSES), C_FINAL)
    fc_b = 0.01 * jax.random.normal(ks[8], (1, N_CLASSES), jnp.float32)

    # Fold BN gamma into conv weights ONCE here (not per-forward); pad for alignment;
    # pre-cast matmul operands to bf16 (f32 betas stay f32 for the epilogue).
    stem_w2d = stem_w.reshape(9 * C_IN, C_STEM) * stem_g            # [27, 32]
    stem_w2d = jnp.pad(stem_w2d, ((0, 32 - 9 * C_IN), (0, 0)))      # K: 27 -> 32
    b1_w2d = b1_w.reshape(9 * C_STEM, C_MID) * b1_g                 # [288, 64]
    b2_w2d = b2_w.reshape(C_MID, C_FINAL) * b2_g                    # [64, 2048]
    fc_w_pad = jnp.pad(fc_w, ((0, 0), (0, N_CLASSES_PAD - N_CLASSES)))
    fc_b_pad = jnp.pad(fc_b, ((0, 0), (0, N_CLASSES_PAD - N_CLASSES)))

    return {
        "stem_w": stem_w2d.astype(jnp.bfloat16), "stem_b": stem_b,
        "b1_w": b1_w2d.astype(jnp.bfloat16), "b1_b": b1_b,
        "b2_w": b2_w2d.astype(jnp.bfloat16), "b2_b": b2_b,
        "fc_w": fc_w_pad.astype(jnp.bfloat16), "fc_b": fc_b_pad,
    }


@jax.jit
def student_slimmed_fps_forward(params, x_nchw):
    """Returns (logits, fms0, fms) — fms0/fms in NCHW like the PyTorch module."""
    x = jnp.transpose(x_nchw, (0, 2, 3, 1)).astype(jnp.float32)     # NCHW -> NHWC
    Nb = x.shape[0]

    # stem: 3x3 s1 p1 conv + folded-BN + ReLU  (Pallas kernel A)
    p0, (_, Ho0, Wo0) = im2col(x, 3, 3, 1, 1)                       # [N*256, 27]
    p0 = jnp.pad(p0, ((0, 0), (0, 32 - p0.shape[1]))).astype(jnp.bfloat16)
    fms0_flat = stem_conv(p0, params["stem_w"], params["stem_b"])    # [N*256, 32]
    fms0_nhwc = fms0_flat.reshape(Nb, Ho0, Wo0, C_STEM)

    # b1 (3x3 s2 p1) + b2 (1x1) + AdaptiveAvgPool2d(1) + fc  (single fused kernel B)
    p1, (_, Ho1, Wo1) = im2col(fms0_nhwc, 3, 3, 2, 1)                # [N*64, 288]
    p1 = p1.astype(jnp.bfloat16)
    fms_flat, logits_pad = tail_fused(
        p1, params["b1_w"], params["b1_b"], params["b2_w"], params["b2_b"],
        params["fc_w"], params["fc_b"], nb=Nb, spatial=Ho1 * Wo1)    # [N*64,2048],[N,256]
    fms_nhwc = fms_flat.reshape(Nb, Ho1, Wo1, C_FINAL)

    logits = logits_pad[:, :N_CLASSES]
    fms0 = jnp.transpose(fms0_nhwc, (0, 3, 1, 2))                    # NHWC -> NCHW
    fms = jnp.transpose(fms_nhwc, (0, 3, 1, 2))
    return logits, fms0, fms


# ----------------------------------------------------------------------------
if __name__ == "__main__":
    key = jax.random.PRNGKey(0)
    k_param, k_x = jax.random.split(key)

    params = init_params(k_param)
    x = jax.random.normal(k_x, (2, 3, 16, 16), jnp.float32)          # NCHW input

    logits, fms0, fms = student_slimmed_fps_forward(params, x)
    jax.block_until_ready((logits, fms0, fms))

    assert logits.shape == (2, 200)
    assert fms0.shape == (2, 32, 16, 16)
    assert fms.shape == (2, 2048, 8, 8)
    assert bool(jnp.all(jnp.isfinite(logits)))

    print("KERNEL_OK")
</pallas_src>

<mosaic_0001>
module attributes {stable_mosaic.version = 11 : i64} {
  func.func @_stem_kernel(%arg0: i32, %arg1: memref<128x32xbf16, #tpu.memory_space<vmem>>, %arg2: memref<32x32xbf16, #tpu.memory_space<vmem>>, %arg3: memref<1x32xf32, #tpu.memory_space<vmem>>, %arg4: memref<128x32xf32, #tpu.memory_space<vmem>>) attributes {dimension_semantics = [#tpu.dimension_semantics<parallel>], iteration_bounds = array<i64: 4>, scalar_prefetch = 0 : i64, scratch_operands = 0 : i64, tpu.core_type = #tpu.core_type<tc>, window_params = [{transform_indices = @transform_0, window_bounds = array<i64: 128, 32>}, {pipeline_mode = #tpu.pipeline_mode<synchronous>, transform_indices = @transform_1, window_bounds = array<i64: 32, 32>}, {pipeline_mode = #tpu.pipeline_mode<synchronous>, transform_indices = @transform_2, window_bounds = array<i64: 1, 32>}, {transform_indices = @transform_3, window_bounds = array<i64: 128, 32>}]} {
    %c0 = arith.constant 0 : index
    %c0_0 = arith.constant 0 : index
    %0 = vector.load %arg1[%c0, %c0_0] : memref<128x32xbf16, #tpu.memory_space<vmem>>, vector<128x32xbf16>
    %c0_1 = arith.constant 0 : index
    %c0_2 = arith.constant 0 : index
    %1 = vector.load %arg2[%c0_1, %c0_2] : memref<32x32xbf16, #tpu.memory_space<vmem>>, vector<32x32xbf16>
    %cst = arith.constant dense<0.000000e+00> : vector<128x32xf32>
    %2 = tpu.matmul %0, %1, %cst {dimension_numbers = #tpu.dot_dimension_numbers<[1], [0], [0], [1], [0, 0, 1, 1], [], []>} : vector<128x32xbf16>, vector<32x32xbf16>, vector<128x32xf32> -> vector<128x32xf32>
    %c0_3 = arith.constant 0 : index
    %c0_4 = arith.constant 0 : index
    %3 = vector.load %arg3[%c0_3, %c0_4] : memref<1x32xf32, #tpu.memory_space<vmem>>, vector<1x32xf32>
    %4 = vector.broadcast %3 : vector<1x32xf32> to vector<128x32xf32>
    %5 = arith.addf %2, %4 : vector<128x32xf32>
    %cst_5 = arith.constant 0.000000e+00 : f32
    %6 = vector.broadcast %cst_5 : f32 to vector<128x32xf32>
    %7 = arith.maximumf %5, %6 : vector<128x32xf32>
    %c0_6 = arith.constant 0 : index
    %c0_7 = arith.constant 0 : index
    %8 = vector.load %arg4[%c0_6, %c0_7] : memref<128x32xf32, #tpu.memory_space<vmem>>, vector<128x32xf32>
    tpu.vector_store %arg4[%c0_6, %c0_7], %7 {strides = array<i32>} : memref<128x32xf32, #tpu.memory_space<vmem>>, vector<128x32xf32>,
    return
  }
  func.func @transform_0(%arg0: i32) -> (i32, i32) {
    %c0_i32 = arith.constant 0 : i32
    %c0_i32_0 = arith.constant 0 : i32
    return %arg0, %c0_i32 : i32, i32
  }
  func.func @transform_1(%arg0: i32) -> (i32, i32) {
    %c0_i32 = arith.constant 0 : i32
    %c0_i32_0 = arith.constant 0 : i32
    %c0_i32_1 = arith.constant 0 : i32
    return %c0_i32, %c0_i32_0 : i32, i32
  }
  func.func @transform_2(%arg0: i32) -> (i32, i32) {
    %c0_i32 = arith.constant 0 : i32
    %c0_i32_0 = arith.constant 0 : i32
    %c0_i32_1 = arith.constant 0 : i32
    return %c0_i32, %c0_i32_0 : i32, i32
  }
  func.func @transform_3(%arg0: i32) -> (i32, i32) {
    %c0_i32 = arith.constant 0 : i32
    %c0_i32_0 = arith.constant 0 : i32
    return %arg0, %c0_i32 : i32, i32
  }
}

module attributes {stable_mosaic.version = 11 : i64} {
  func.func @_tail_kernel(%arg0: i32, %arg1: memref<128x288xbf16, #tpu.memory_space<vmem>>, %arg2: memref<288x64xbf16, #tpu.memory_space<vmem>>, %arg3: memref<1x64xf32, #tpu.memory_space<vmem>>, %arg4: memref<64x512xbf16, #tpu.memory_space<vmem>>, %arg5: memref<1x512xf32, #tpu.memory_space<vmem>>, %arg6: memref<512x256xbf16, #tpu.memory_space<vmem>>, %arg7: memref<1x256xf32, #tpu.memory_space<vmem>>, %arg8: memref<128x512xf32, #tpu.memory_space<vmem>>, %arg9: memref<2x256xf32, #tpu.memory_space<vmem>>, %arg10: memref<128x64xbf16, #tpu.memory_space<vmem>>) attributes {dimension_semantics = [#tpu.dimension_semantics<arbitrary>], iteration_bounds = array<i64: 4>, scalar_prefetch = 0 : i64, scratch_operands = 1 : i64, tpu.core_type = #tpu.core_type<tc>, window_params = [{pipeline_mode = #tpu.pipeline_mode<synchronous>, transform_indices = @transform_0, window_bounds = array<i64: 128, 288>}, {pipeline_mode = #tpu.pipeline_mode<synchronous>, transform_indices = @transform_1, window_bounds = array<i64: 288, 64>}, {pipeline_mode = #tpu.pipeline_mode<synchronous>, transform_indices = @transform_2, window_bounds = array<i64: 1, 64>}, {transform_indices = @transform_3, window_bounds = array<i64: 64, 512>}, {transform_indices = @transform_4, window_bounds = array<i64: 1, 512>}, {transform_indices = @transform_5, window_bounds = array<i64: 512, 256>}, {pipeline_mode = #tpu.pipeline_mode<synchronous>, transform_indices = @transform_6, window_bounds = array<i64: 1, 256>}, {transform_indices = @transform_7, window_bounds = array<i64: 128, 512>}, {pipeline_mode = #tpu.pipeline_mode<synchronous>, transform_indices = @transform_8, window_bounds = array<i64: 2, 256>}]} {
    %c0_i32 = arith.constant 0 : i32
    %0 = arith.cmpi eq, %arg0, %c0_i32 : i32
    %1 = arith.extui %0 : i1 to i32
    %c0_i32_0 = arith.constant 0 : i32
    %2 = arith.cmpi ne, %1, %c0_i32_0 : i32
    scf.if %2 {
      %c0_20 = arith.constant 0 : index
      %c0_21 = arith.constant 0 : index
      %29 = vector.load %arg1[%c0_20, %c0_21] : memref<128x288xbf16, #tpu.memory_space<vmem>>, vector<128x288xbf16>
      %c0_22 = arith.constant 0 : index
      %c0_23 = arith.constant 0 : index
      %30 = vector.load %arg2[%c0_22, %c0_23] : memref<288x64xbf16, #tpu.memory_space<vmem>>, vector<288x64xbf16>
      %cst_24 = arith.constant dense<0.000000e+00> : vector<128x64xf32>
      %31 = tpu.matmul %29, %30, %cst_24 {dimension_numbers = #tpu.dot_dimension_numbers<[1], [0], [0], [1], [0, 0, 1, 1], [], []>} : vector<128x288xbf16>, vector<288x64xbf16>, vector<128x64xf32> -> vector<128x64xf32>
      %c0_25 = arith.constant 0 : index
      %c0_26 = arith.constant 0 : index
      %32 = vector.load %arg3[%c0_25, %c0_26] : memref<1x64xf32, #tpu.memory_space<vmem>>, vector<1x64xf32>
      %33 = vector.broadcast %32 : vector<1x64xf32> to vector<128x64xf32>
      %34 = arith.addf %31, %33 : vector<128x64xf32>
      %cst_27 = arith.constant 0.000000e+00 : f32
      %35 = vector.broadcast %cst_27 : f32 to vector<128x64xf32>
      %36 = arith.maximumf %34, %35 : vector<128x64xf32>
      %37 = arith.truncf %36 : vector<128x64xf32> to vector<128x64xbf16>
      %c0_28 = arith.constant 0 : index
      %c0_29 = arith.constant 0 : index
      %38 = vector.load %arg10[%c0_28, %c0_29] : memref<128x64xbf16, #tpu.memory_space<vmem>>, vector<128x64xbf16>
      tpu.vector_store %arg10[%c0_28, %c0_29], %37 {strides = array<i32>} : memref<128x64xbf16, #tpu.memory_space<vmem>>, vector<128x64xbf16>,
      %cst_30 = arith.constant 0.000000e+00 : f32
      %39 = vector.broadcast %cst_30 : f32 to vector<2x256xf32>
      %c0_31 = arith.constant 0 : index
      %c0_32 = arith.constant 0 : index
      %40 = vector.load %arg7[%c0_31, %c0_32] : memref<1x256xf32, #tpu.memory_space<vmem>>, vector<1x256xf32>
      %41 = vector.broadcast %40 : vector<1x256xf32> to vector<2x256xf32>
      %42 = arith.addf %39, %41 : vector<2x256xf32>
      %c0_33 = arith.constant 0 : index
      %c0_34 = arith.constant 0 : index
      %43 = vector.load %arg9[%c0_33, %c0_34] : memref<2x256xf32, #tpu.memory_space<vmem>>, vector<2x256xf32>
      tpu.vector_store %arg9[%c0_33, %c0_34], %42 {strides = array<i32>} : memref<2x256xf32, #tpu.memory_space<vmem>>, vector<2x256xf32>,
    } else {
    }
    %c0 = arith.constant 0 : index
    %c0_1 = arith.constant 0 : index
    %3 = vector.load %arg10[%c0, %c0_1] : memref<128x64xbf16, #tpu.memory_space<vmem>>, vector<128x64xbf16>
    %c0_2 = arith.constant 0 : index
    %c0_3 = arith.constant 0 : index
    %4 = vector.load %arg4[%c0_2, %c0_3] : memref<64x512xbf16, #tpu.memory_space<vmem>>, vector<64x512xbf16>
    %cst = arith.constant dense<0.000000e+00> : vector<128x512xf32>
    %5 = tpu.matmul %3, %4, %cst {dimension_numbers = #tpu.dot_dimension_numbers<[1], [0], [0], [1], [0, 0, 1, 1], [], []>} : vector<128x64xbf16>, vector<64x512xbf16>, vector<128x512xf32> -> vector<128x512xf32>
    %c0_4 = arith.constant 0 : index
    %c0_5 = arith.constant 0 : index
    %6 = vector.load %arg5[%c0_4, %c0_5] : memref<1x512xf32, #tpu.memory_space<vmem>>, vector<1x512xf32>
    %7 = vector.broadcast %6 : vector<1x512xf32> to vector<128x512xf32>
    %8 = arith.addf %5, %7 : vector<128x512xf32>
    %cst_6 = arith.constant 0.000000e+00 : f32
    %9 = vector.broadcast %cst_6 : f32 to vector<128x512xf32>
    %10 = arith.maximumf %8, %9 : vector<128x512xf32>
    %c0_7 = arith.constant 0 : index
    %c0_8 = arith.constant 0 : index
    %11 = vector.load %arg8[%c0_7, %c0_8] : memref<128x512xf32, #tpu.memory_space<vmem>>, vector<128x512xf32>
    tpu.vector_store %arg8[%c0_7, %c0_8], %10 {strides = array<i32>} : memref<128x512xf32, #tpu.memory_space<vmem>>, vector<128x512xf32>,
    %12 = vector.extract_strided_slice %10 {offsets = [0, 0], sizes = [64, 512], strides = [1, 1]} : vector<128x512xf32> to vector<64x512xf32>
    %cst_9 = arith.constant dense<0.000000e+00> : vector<512xf32>
    %13 = vector.multi_reduction <add>, %12, %cst_9 [0] : vector<64x512xf32> to vector<512xf32>
    %14 = vector.shape_cast %13 : vector<512xf32> to vector<1x512xf32>
    %cst_10 = arith.constant 6.400000e+01 : f32
    %15 = vector.broadcast %cst_10 : f32 to vector<1x512xf32>
    %16 = arith.divf %14, %15 : vector<1x512xf32>
    %17 = vector.extract_strided_slice %10 {offsets = [64, 0], sizes = [64, 512], strides = [1, 1]} : vector<128x512xf32> to vector<64x512xf32>
    %cst_11 = arith.constant dense<0.000000e+00> : vector<512xf32>
    %18 = vector.multi_reduction <add>, %17, %cst_11 [0] : vector<64x512xf32> to vector<512xf32>
    %19 = vector.shape_cast %18 : vector<512xf32> to vector<1x512xf32>
    %cst_12 = arith.constant 6.400000e+01 : f32
    %20 = vector.broadcast %cst_12 : f32 to vector<1x512xf32>
    %21 = arith.divf %19, %20 : vector<1x512xf32>
    %22 = tpu.concatenate %16, %21 in 0 : vector<1x512xf32>, vector<1x512xf32> -> vector<2x512xf32>
    %23 = arith.truncf %22 : vector<2x512xf32> to vector<2x512xbf16>
    %c0_13 = arith.constant 0 : index
    %c0_14 = arith.constant 0 : index
    %24 = vector.load %arg9[%c0_13, %c0_14] : memref<2x256xf32, #tpu.memory_space<vmem>>, vector<2x256xf32>
    %c0_15 = arith.constant 0 : index
    %c0_16 = arith.constant 0 : index
    %25 = vector.load %arg6[%c0_15, %c0_16] : memref<512x256xbf16, #tpu.memory_space<vmem>>, vector<512x256xbf16>
    %cst_17 = arith.constant dense<0.000000e+00> : vector<2x256xf32>
    %26 = tpu.matmul %23, %25, %cst_17 {dimension_numbers = #tpu.dot_dimension_numbers<[1], [0], [0], [1], [0, 0, 1, 1], [], []>} : vector<2x512xbf16>, vector<512x256xbf16>, vector<2x256xf32> -> vector<2x256xf32>
    %27 = arith.addf %24, %26 : vector<2x256xf32>
    %c0_18 = arith.constant 0 : index
    %c0_19 = arith.constant 0 : index
    %28 = vector.load %arg9[%c0_18, %c0_19] : memref<2x256xf32, #tpu.memory_space<vmem>>, vector<2x256xf32>
    tpu.vector_store %arg9[%c0_18, %c0_19], %27 {strides = array<i32>} : memref<2x256xf32, #tpu.memory_space<vmem>>, vector<2x256xf32>,
    return
  }
  func.func @transform_0(%arg0: i32) -> (i32, i32) {
    %c0_i32 = arith.constant 0 : i32
    %c0_i32_0 = arith.constant 0 : i32
    %c0_i32_1 = arith.constant 0 : i32
    return %c0_i32, %c0_i32_0 : i32, i32
  }
  func.func @transform_1(%arg0: i32) -> (i32, i32) {
    %c0_i32 = arith.constant 0 : i32
    %c0_i32_0 = arith.constant 0 : i32
    %c0_i32_1 = arith.constant 0 : i32
    return %c0_i32, %c0_i32_0 : i32, i32
  }
  func.func @transform_2(%arg0: i32) -> (i32, i32) {
    %c0_i32 = arith.constant 0 : i32
    %c0_i32_0 = arith.constant 0 : i32
    %c0_i32_1 = arith.constant 0 : i32
    return %c0_i32, %c0_i32_0 : i32, i32
  }
  func.func @transform_3(%arg0: i32) -> (i32, i32) {
    %c0_i32 = arith.constant 0 : i32
    %c0_i32_0 = arith.constant 0 : i32
    return %c0_i32, %arg0 : i32, i32
  }
  func.func @transform_4(%arg0: i32) -> (i32, i32) {
    %c0_i32 = arith.constant 0 : i32
    %c0_i32_0 = arith.constant 0 : i32
    return %c0_i32, %arg0 : i32, i32
  }
  func.func @transform_5(%arg0: i32) -> (i32, i32) {
    %c0_i32 = arith.constant 0 : i32
    %c0_i32_0 = arith.constant 0 : i32
    return %arg0, %c0_i32 : i32, i32
  }
  func.func @transform_6(%arg0: i32) -> (i32, i32) {
    %c0_i32 = arith.constant 0 : i32
    %c0_i32_0 = arith.constant 0 : i32
    %c0_i32_1 = arith.constant 0 : i32
    return %c0_i32, %c0_i32_0 : i32, i32
  }
  func.func @transform_7(%arg0: i32) -> (i32, i32) {
    %c0_i32 = arith.constant 0 : i32
    %c0_i32_0 = arith.constant 0 : i32
    return %c0_i32, %arg0 : i32, i32
  }
  func.func @transform_8(%arg0: i32) -> (i32, i32) {
    %c0_i32 = arith.constant 0 : i32
    %c0_i32_0 = arith.constant 0 : i32
    %c0_i32_1 = arith.constant 0 : i32
    return %c0_i32, %c0_i32_0 : i32, i32
  }
}

</mosaic_0001>

<llo_original>
// kernel: student_slimmed_fps_forward.2
$region0: #{student_slimmed_fps_forward.2}
  #allocation0 [shape = 'u32[]', space=smem, size = 0x4, offset = 0x4, fixed_abs, tag = 'smem constant byte address 0x4 - core index']
  #allocation1 [shape = 'u32[144,128]{1,0:T(1,128)}', space=vmem, size = 0x12000, scoped, tag = 'internal scratch']
  %s0 = inlined_call_operand.vmem [shape: bf16[512,32], index: 0, kind: input, shape index: {}]
  %s1 = inlined_call_operand.vmem [shape: bf16[32,32], index: 1, kind: input, shape index: {}]
  %s2 = inlined_call_operand.vmem [shape: f32[1,32], index: 2, kind: input, shape index: {}]
  %s3 = inlined_call_operand.vmem [shape: f32[512,32], index: 3, kind: output, shape index: {}]
  %s4 = sld [smem:[#allocation0]]
  $region45: #{student_slimmed_fps_forward.2} parent=0
    _
  %s6 = ssub.s32 1, %s4
  %s7 = scalar_select 0, %s6, %s4
  loop: start=0, step=1, limit=6
  $region2: #{student_slimmed_fps_forward.2} parent=0 // loop_pre_header
    _
  $region3: #{student_slimmed_fps_forward.2} parent=0 // loop_header
    %s9 = sphi 0, %s13
    %p10 = scmp.ge.s32.totalorder %s9, 6
    %s19 = sphi 0, %s21
    %s22 = sphi 0, %s19
    %s23 = sphi 0, %s22
    %s39 = sphi 0, %s23
    %s43 = sphi 0, %s43
    %s45 = sphi 0, %s43
    %s46 = sphi 0, %s45
    %s60 = sphi 0, %s46
    %s64 = sphi 0, %s64
    %s66 = sphi 0, %s64
    %s67 = sphi 0, %s66
    %s81 = sphi 0, %s67
    %s87 = sphi 0, %s89
    %s90 = sphi 0, %s87
    %s91 = sphi 0, %s90
    %s107 = sphi 0, %s91
  $region4: #{student_slimmed_fps_forward.2} parent=0 // loop_header_branch
    %12 = sbr.rel (%p10) target = $region8
  $region5: #{student_slimmed_fps_forward.2} parent=0 // loop_body
    %s14 = ssub.s32 %s9, 1
    %s15 = ssub.s32 %s9, 2
    %s16 = sadd.s32 %s9, 1
    %s17 = ssub.s32 %s9, %s16
    %p18 = scmp.eq.s32.totalorder %s17, 0
    %s20 = sadd.s32 %s19, 1
    %s21 = scalar_select %p18, %s19, %s20
    %p24 = pneg %p18
    %p25 = scmp.eq.s32.totalorder %s9, 3
    %p26 = por %p24, %p25
    %p27 = scmp.ne.s32.totalorder %s19, %s22
    %p28 = scmp.eq.s32.totalorder %s9, 0
    %p29 = por %p27, %p28
    %p30 = scmp.ne.s32.totalorder %s19, %s22
    %p31 = scmp.eq.s32.totalorder %s14, 3
    %p32 = por %p30, %p31
    %p33 = scmp.ne.s32.totalorder %s22, %s23
    %p34 = scmp.eq.s32.totalorder %s14, 0
    %p35 = por %p33, %p34
    %p36 = scmp.ne.s32.totalorder %s22, %s23
    %p37 = scmp.eq.s32.totalorder %s15, 3
    %p38 = por %p36, %p37
    %p40 = scmp.ne.s32.totalorder %s23, %s39
    %p41 = scmp.eq.s32.totalorder %s15, 0
    %p42 = por %p40, %p41
    %s44 = sadd.s32 %s43, 1
    %p47 = scmp.eq.s32.totalorder %s9, 3
    %p48 = scmp.ne.s32.totalorder %s43, %s45
    %p49 = scmp.eq.s32.totalorder %s9, 0
    %p50 = por %p48, %p49
    %p51 = scmp.ne.s32.totalorder %s43, %s45
    %p52 = scmp.eq.s32.totalorder %s14, 3
    %p53 = por %p51, %p52
    %p54 = scmp.ne.s32.totalorder %s45, %s46
    %p55 = scmp.eq.s32.totalorder %s14, 0
    %p56 = por %p54, %p55
    %p57 = scmp.ne.s32.totalorder %s45, %s46
    %p58 = scmp.eq.s32.totalorder %s15, 3
    %p59 = por %p57, %p58
    %p61 = scmp.ne.s32.totalorder %s46, %s60
    %p62 = scmp.eq.s32.totalorder %s15, 0
    %p63 = por %p61, %p62
    %s65 = sadd.s32 %s64, 1
    %p68 = scmp.eq.s32.totalorder %s9, 3
    %p69 = scmp.ne.s32.totalorder %s64, %s66
    %p70 = scmp.eq.s32.totalorder %s9, 0
    %p71 = por %p69, %p70
    %p72 = scmp.ne.s32.totalorder %s64, %s66
    %p73 = scmp.eq.s32.totalorder %s14, 3
    %p74 = por %p72, %p73
    %p75 = scmp.ne.s32.totalorder %s66, %s67
    %p76 = scmp.eq.s32.totalorder %s14, 0
    %p77 = por %p75, %p76
    %p78 = scmp.ne.s32.totalorder %s66, %s67
    %p79 = scmp.eq.s32.totalorder %s15, 3
    %p80 = por %p78, %p79
    %p82 = scmp.ne.s32.totalorder %s67, %s81
    %p83 = scmp.eq.s32.totalorder %s15, 0
    %p84 = por %p82, %p83
    %s85 = ssub.s32 %s9, %s16
    %p86 = scmp.eq.s32.totalorder %s85, 0
    %s88 = sadd.s32 %s87, 1
    %s89 = scalar_select %p86, %s87, %s88
    %p92 = pneg %p86
    %p93 = scmp.eq.s32.totalorder %s9, 3
    %p94 = por %p92, %p93
    %p95 = scmp.ne.s32.totalorder %s87, %s90
    %p96 = scmp.eq.s32.totalorder %s9, 0
    %p97 = por %p95, %p96
    %p98 = scmp.ne.s32.totalorder %s87, %s90
    %p99 = scmp.eq.s32.totalorder %s14, 3
    %p100 = por %p98, %p99
    %p101 = scmp.ne.s32.totalorder %s90, %s91
    %p102 = scmp.eq.s32.totalorder %s14, 0
    %p103 = por %p101, %p102
    %p104 = scmp.ne.s32.totalorder %s90, %s91
    %p105 = scmp.eq.s32.totalorder %s15, 3
    %p106 = por %p104, %p105
    %p108 = scmp.ne.s32.totalorder %s91, %s107
    %p109 = scmp.eq.s32.totalorder %s15, 0
    %p110 = por %p108, %p109
    %p111 = scmp.le.s32.totalorder 1, %s9
    %p112 = scmp.lt.s32.totalorder %s9, 5
    %p113 = pnand %p111, %p112
    %p114 = pneg %p113
    // Predicated region
    $region9: #{student_slimmed_fps_forward.2} parent=5 // pred_check
      _
    $region10: #{student_slimmed_fps_forward.2} parent=5 // pred_check_branch
      %116 = sbr.rel (%p113) target = $region12
    $region11: #{student_slimmed_fps_forward.2} parent=5 // pred_region
      %s117 = ssub.s32 %s9, 1
      // Predicated region
      $region13: #{student_slimmed_fps_forward.2} parent=11 // pred_check
        %p118 = pneg %p56
      $region14: #{student_slimmed_fps_forward.2} parent=11 // pred_check_branch
        %120 = sbr.rel (%p118) target = $region16
      $region15: #{student_slimmed_fps_forward.2} parent=11 // pred_region
        _
      $region16: #{student_slimmed_fps_forward.2} parent=11 // pred_fallthru
        _
      // Predicated region
      $region17: #{student_slimmed_fps_forward.2} parent=11 // pred_check
        %p121 = pneg %p77
      $region18: #{student_slimmed_fps_forward.2} parent=11 // pred_check_branch
        %123 = sbr.rel (%p121) target = $region20
      $region19: #{student_slimmed_fps_forward.2} parent=11 // pred_region
        _
      $region20: #{student_slimmed_fps_forward.2} parent=11 // pred_fallthru
        _
    $region12: #{student_slimmed_fps_forward.2} parent=5 // pred_fallthru
      _
    %p124 = scmp.lt.s32.totalorder %s9, 4
    // Predicated region
    $region21: #{student_slimmed_fps_forward.2} parent=5 // pred_check
      %p125 = pneg %p124
    $region22: #{student_slimmed_fps_forward.2} parent=5 // pred_check_branch
      %127 = sbr.rel (%p125) target = $region24
    $region23: #{student_slimmed_fps_forward.2} parent=5 // pred_region
      // Predicated region
      $region25: #{student_slimmed_fps_forward.2} parent=23 // pred_check
        %p128 = pneg %p29
      $region26: #{student_slimmed_fps_forward.2} parent=23 // pred_check_branch
        %130 = sbr.rel (%p128) target = $region28
      $region27: #{student_slimmed_fps_forward.2} parent=23 // pred_region
        %s131 = smul.u32 16, %s9
        %p132 = scmp.lt.s32.totalorder %s131, 63
        %s133 = scalar_select %p132, %s131, 63
        %s134 = smul.addr %s133, 4
        %s135 = scalar_lea.vmem %s0, %s134
        %s136 = smul.u32 16, %s9
      $region28: #{student_slimmed_fps_forward.2} parent=23 // pred_fallthru
        _
    $region24: #{student_slimmed_fps_forward.2} parent=5 // pred_fallthru
      _
    %p137 = scmp.le.s32.totalorder 1, %s9
    %p138 = scmp.lt.s32.totalorder %s9, 5
    %p139 = pnand %p137, %p138
    %p140 = pneg %p139
    // Predicated region
    $region29: #{student_slimmed_fps_forward.2} parent=5 // pred_check
      _
    $region30: #{student_slimmed_fps_forward.2} parent=5 // pred_check_branch
      %142 = sbr.rel (%p139) target = $region32
    $region31: #{student_slimmed_fps_forward.2} parent=5 // pred_region
      %s143 = ssub.s32 %s9, 1
      %s144 = smul.u32 16, %s14
      %p145 = scmp.lt.s32.totalorder %s144, 63
      %s146 = scalar_select %p145, %s144, 63
      %s147 = smul.addr %s146, 4
      %s148 = scalar_lea.vmem %s0, %s147
      %p149 = pneg %p35
      %p150 = pneg %p32
      %p151 = pneg %p56
      %p152 = pneg %p53
      %p153 = pneg %p77
      %p154 = pneg %p74
      %p155 = pneg %p103
      %p156 = pneg %p100
      %s157 = smul.u32 16, %s14
      %p158 = scmp.lt.s32.totalorder %s157, 63
      %s159 = scalar_select %p158, %s157, 63
      %s160 = smul.addr %s159, 8
      %s161 = scalar_lea.vmem %s3, %s160
      %s162 = smul.u32 16, %s14
      %p163 = scmp.lt.s32.totalorder %s162, 63
      %s164 = scalar_select %p163, %s162, 63
      %s165 = smul.addr %s164, 4
      %s166 = scalar_lea.vmem %s0, %s165
      %s167 = smul.u32 16, %s14
      %s168 = smul.u32 16, %s14
      %p169 = scmp.lt.s32.totalorder %s168, 63
      %s170 = scalar_select %p169, %s168, 63
      %s171 = smul.addr %s170, 8
      %s172 = scalar_lea.vmem %s3, %s171
      %s173 = smul.u32 16, %s14
      %v175 = vld [vmem:[%s166] sm:$0xf]
      %v176 = vld [vmem:[%s166 + $0x4] sm:$0xf]
      %v177 = vld [vmem:[%s166 + $0x8] sm:$0xf]
      %v178 = vld [vmem:[%s166 + $0xc] sm:$0xf]
      %v179 = vld [vmem:[%s166 + $0x10] sm:$0xf]
      %v180 = vld [vmem:[%s166 + $0x14] sm:$0xf]
      %v181 = vld [vmem:[%s166 + $0x18] sm:$0xf]
      %v182 = vld [vmem:[%s166 + $0x1c] sm:$0xf]
      %v183 = vld [vmem:[%s166 + $0x20] sm:$0xf]
      %v184 = vld [vmem:[%s166 + $0x24] sm:$0xf]
      %v185 = vld [vmem:[%s166 + $0x28] sm:$0xf]
      %v186 = vld [vmem:[%s166 + $0x2c] sm:$0xf]
      %v187 = vld [vmem:[%s166 + $0x30] sm:$0xf]
      %v188 = vld [vmem:[%s166 + $0x34] sm:$0xf]
      %v189 = vld [vmem:[%s166 + $0x38] sm:$0xf]
      %v190 = vld [vmem:[%s166 + $0x3c] sm:$0xf]
      %v191 = vld [vmem:[%s1] sm:$0xf]
      %v192 = vld [vmem:[%s1 + $0x4] sm:$0xf]
      %v193 = vld [vmem:[%s1 + $0x8] sm:$0xf]
      %v194 = vld [vmem:[%s1 + $0xc] sm:$0xf]
      %v195 = vld [vmem:[%s2] sm:$0x1]
      %v197 = vlaneseq
      %v198 = vshrl.u32 %v197, 7
      %v199 = vsub.s32 0, %v198
      %v200 = vrot.slane %v195, %v199
      %v218 = vunpack.c.l.b16 %v175
      %v219 = vunpack.c.l.b16 %v176
      %v220 = vunpack.c.l.b16 %v177
      %v221 = vunpack.c.l.b16 %v178
      %v222 = vunpack.c.l.b16 %v179
      %v223 = vunpack.c.l.b16 %v180
      %v224 = vunpack.c.l.b16 %v181
      %v225 = vunpack.c.l.b16 %v182
      %v226 = vunpack.c.l.b16 %v183
      %v227 = vunpack.c.l.b16 %v184
      %v228 = vunpack.c.l.b16 %v185
      %v229 = vunpack.c.l.b16 %v186
      %v230 = vunpack.c.l.b16 %v187
      %v231 = vunpack.c.l.b16 %v188
      %v232 = vunpack.c.l.b16 %v189
      %v233 = vunpack.c.l.b16 %v190
      %v234 = vpack.c.b16 %v219, %v218
      %v235 = vpack.c.b16 %v221, %v220
      %v236 = vpack.c.b16 %v223, %v222
      %v237 = vpack.c.b16 %v225, %v224
      %v238 = vpack.c.b16 %v227, %v226
      %v239 = vpack.c.b16 %v229, %v228
      %v240 = vpack.c.b16 %v231, %v230
      %v241 = vpack.c.b16 %v233, %v232
      %v246 = vunpack.c.l.b16 %v191
      %v247 = vunpack.c.l.b16 %v192
      %v248 = vunpack.c.l.b16 %v193
      %v249 = vunpack.c.l.b16 %v194
      %v250 = vpack.c.b16 %v247, %v246
      %v251 = vpack.c.b16 %v249, %v248
      %vm254 = vcmask 261120
      %v256 = vsel %vm254, %v234, 0
      %v259 = vsel %vm254, %v235, 0
      %v262 = vsel %vm254, %v236, 0
      %v265 = vsel %vm254, %v237, 0
      %v268 = vsel %vm254, %v238, 0
      %v271 = vsel %vm254, %v239, 0
      %v274 = vsel %vm254, %v240, 0
      %v277 = vsel %vm254, %v241, 0
      %279 = vmatprep.subr.bf16.mxu0 0
      %280 = vmatpush1.bf16.msra.mxu0 %v250
      %281 = vmatprep.subr.bf16.mxu0 0
      %282 = vmatpush1.bf16.msra.mxu0 %v251
      %283 = vmatprep.subr.bf16.mxu0 0
      %284 = vmatpush1.bf16.msra.mxu0 0
      %285 = vmatprep.subr.bf16.mxu0 0
      %286 = vmatpush1.bf16.msra.mxu0 0
      %287 = vmatprep.subr.bf16.mxu0 0
      %288 = vmatpush1.bf16.msra.mxu0 0
      %289 = vmatprep.subr.bf16.mxu0 0
      %290 = vmatpush1.bf16.msra.mxu0 0
      %291 = vmatprep.subr.bf16.mxu0 0
      %292 = vmatpush1.bf16.msra.mxu0 0
      %293 = vmatprep.subr.bf16.mxu0 0
      %294 = vmatpush1.bf16.msra.mxu0 0
      %295 = vmatprep.subr.bf16.mxu0 0
      %296 = vmatpush1.bf16.msra.mxu0 0
      %297 = vmatprep.subr.bf16.mxu0 0
      %298 = vmatpush1.bf16.msra.mxu0 0
      %299 = vmatprep.subr.bf16.mxu0 0
      %300 = vmatpush1.bf16.msra.mxu0 0
      %301 = vmatprep.subr.bf16.mxu0 0
      %302 = vmatpush1.bf16.msra.mxu0 0
      %303 = vmatprep.subr.bf16.mxu0 0
      %304 = vmatpush1.bf16.msra.mxu0 0
      %305 = vmatprep.subr.bf16.mxu0 0
      %306 = vmatpush1.bf16.msra.mxu0 0
      %307 = vmatprep.subr.bf16.mxu0 0
      %308 = vmatpush1.bf16.msra.mxu0 0
      %309 = vmatprep.subr.bf16.mxu0 0
      %310 = vmatpush1.bf16.msra.mxu0 0
      %311 = vmatprep.mubr.bf16.mxu0 0
      %312 = vmatmul.mubr.bf16.gmra.mrb[0].mxu0 %v256
      %v313 = vpop.f32.mrb[0].mxu0
      %v314 = vadd.f32 %v200, %v313
      %v315 = vpop.f32.mrb[0].mxu0
      %v316 = vpop.f32.mrb[0].mxu0
      %v317 = vadd.f32 %v200, %v316
      %v318 = vpop.f32.mrb[0].mxu0
      %319 = vmatprep.mubr.bf16.mxu0 0
      %320 = vmatmul.mubr.bf16.gmra.mrb[0].mxu0 %v259
      %v321 = vpop.f32.mrb[0].mxu0
      %v322 = vadd.f32 %v200, %v321
      %v323 = vpop.f32.mrb[0].mxu0
      %v324 = vpop.f32.mrb[0].mxu0
      %v325 = vadd.f32 %v200, %v324
      %v326 = vpop.f32.mrb[0].mxu0
      %327 = vmatprep.mubr.bf16.mxu0 0
      %328 = vmatmul.mubr.bf16.gmra.mrb[0].mxu0 %v262
      %v329 = vpop.f32.mrb[0].mxu0
      %v330 = vadd.f32 %v200, %v329
      %v331 = vpop.f32.mrb[0].mxu0
      %v332 = vpop.f32.mrb[0].mxu0
      %v333 = vadd.f32 %v200, %v332
      %v334 = vpop.f32.mrb[0].mxu0
      %335 = vmatprep.mubr.bf16.mxu0 0
      %336 = vmatmul.mubr.bf16.gmra.mrb[0].mxu0 %v265
      %v337 = vpop.f32.mrb[0].mxu0
      %v338 = vadd.f32 %v200, %v337
      %v339 = vpop.f32.mrb[0].mxu0
      %v340 = vpop.f32.mrb[0].mxu0
      %v341 = vadd.f32 %v200, %v340
      %v342 = vpop.f32.mrb[0].mxu0
      %343 = vmatprep.mubr.bf16.mxu0 0
      %344 = vmatmul.mubr.bf16.gmra.mrb[0].mxu0 %v268
      %v345 = vpop.f32.mrb[0].mxu0
      %v346 = vadd.f32 %v200, %v345
      %v347 = vpop.f32.mrb[0].mxu0
      %v348 = vpop.f32.mrb[0].mxu0
      %v349 = vadd.f32 %v200, %v348
      %v350 = vpop.f32.mrb[0].mxu0
      %351 = vmatprep.mubr.bf16.mxu0 0
      %352 = vmatmul.mubr.bf16.gmra.mrb[0].mxu0 %v271
      %v353 = vpop.f32.mrb[0].mxu0
      %v354 = vadd.f32 %v200, %v353
      %v355 = vpop.f32.mrb[0].mxu0
      %v356 = vpop.f32.mrb[0].mxu0
      %v357 = vadd.f32 %v200, %v356
      %v358 = vpop.f32.mrb[0].mxu0
      %359 = vmatprep.mubr.bf16.mxu0 0
      %360 = vmatmul.mubr.bf16.gmra.mrb[0].mxu0 %v274
      %v361 = vpop.f32.mrb[0].mxu0
      %v362 = vadd.f32 %v200, %v361
      %v363 = vpop.f32.mrb[0].mxu0
      %v364 = vpop.f32.mrb[0].mxu0
      %v365 = vadd.f32 %v200, %v364
      %v366 = vpop.f32.mrb[0].mxu0
      %367 = vmatprep.mubr.bf16.mxu0 0
      %368 = vmatmul.mubr.bf16.gmra.mrb[0].mxu0 %v277
      %v369 = vpop.f32.mrb[0].mxu0
      %v370 = vadd.f32 %v200, %v369
      %v371 = vpop.f32.mrb[0].mxu0
      %v372 = vpop.f32.mrb[0].mxu0
      %v373 = vadd.f32 %v200, %v372
      %v374 = vpop.f32.mrb[0].mxu0
      %375 = vdwg.mxu0
      %v376 = vmax.f32 %v314, 0.0
      %v377 = vmax.f32 %v317, 0.0
      %v378 = vmax.f32 %v322, 0.0
      %v379 = vmax.f32 %v325, 0.0
      %v380 = vmax.f32 %v330, 0.0
      %v381 = vmax.f32 %v333, 0.0
      %v382 = vmax.f32 %v338, 0.0
      %v383 = vmax.f32 %v341, 0.0
      %v384 = vmax.f32 %v346, 0.0
      %v385 = vmax.f32 %v349, 0.0
      %v386 = vmax.f32 %v354, 0.0
      %v387 = vmax.f32 %v357, 0.0
      %v388 = vmax.f32 %v362, 0.0
      %v389 = vmax.f32 %v365, 0.0
      %v390 = vmax.f32 %v370, 0.0
      %v391 = vmax.f32 %v373, 0.0
      %392 = vst.msk [vmem:[%s172] sm:$0xff] %vm254, %v376
      %393 = vst.msk [vmem:[%s172 + $0x8] sm:$0xff] %vm254, %v377
      %394 = vst.msk [vmem:[%s172 + $0x10] sm:$0xff] %vm254, %v378
      %395 = vst.msk [vmem:[%s172 + $0x18] sm:$0xff] %vm254, %v379
      %396 = vst.msk [vmem:[%s172 + $0x20] sm:$0xff] %vm254, %v380
      %397 = vst.msk [vmem:[%s172 + $0x28] sm:$0xff] %vm254, %v381
      %398 = vst.msk [vmem:[%s172 + $0x30] sm:$0xff] %vm254, %v382
      %399 = vst.msk [vmem:[%s172 + $0x38] sm:$0xff] %vm254, %v383
      %400 = vst.msk [vmem:[%s172 + $0x40] sm:$0xff] %vm254, %v384
      %401 = vst.msk [vmem:[%s172 + $0x48] sm:$0xff] %vm254, %v385
      %402 = vst.msk [vmem:[%s172 + $0x50] sm:$0xff] %vm254, %v386
      %403 = vst.msk [vmem:[%s172 + $0x58] sm:$0xff] %vm254, %v387
      %404 = vst.msk [vmem:[%s172 + $0x60] sm:$0xff] %vm254, %v388
      %405 = vst.msk [vmem:[%s172 + $0x68] sm:$0xff] %vm254, %v389
      %406 = vst.msk [vmem:[%s172 + $0x70] sm:$0xff] %vm254, %v390
      %407 = vst.msk [vmem:[%s172 + $0x78] sm:$0xff] %vm254, %v391
      %s408 = smul.u32 16, %s14
      %p409 = scmp.lt.s32.totalorder %s408, 63
      %s410 = scalar_select %p409, %s408, 63
      %s411 = smul.addr %s410, 8
      %s412 = scalar_lea.vmem %s3, %s411
      // Predicated region
      $region33: #{student_slimmed_fps_forward.2} parent=31 // pred_check
        %p413 = pneg %p100
      $region34: #{student_slimmed_fps_forward.2} parent=31 // pred_check_branch
        %415 = sbr.rel (%p413) target = $region36
      $region35: #{student_slimmed_fps_forward.2} parent=31 // pred_region
        %s416 = smul.u32 16, %s14
      $region36: #{student_slimmed_fps_forward.2} parent=31 // pred_fallthru
        _
    $region32: #{student_slimmed_fps_forward.2} parent=5 // pred_fallthru
      _
    %p417 = scmp.le.s32.totalorder 2, %s9
    // Predicated region
    $region37: #{student_slimmed_fps_forward.2} parent=5 // pred_check
      %p418 = pneg %p417
    $region38: #{student_slimmed_fps_forward.2} parent=5 // pred_check_branch
      %420 = sbr.rel (%p418) target = $region40
    $region39: #{student_slimmed_fps_forward.2} parent=5 // pred_region
      %s421 = ssub.s32 %s9, 2
      // Predicated region
      $region41: #{student_slimmed_fps_forward.2} parent=39 // pred_check
        %p422 = pneg %p106
      $region42: #{student_slimmed_fps_forward.2} parent=39 // pred_check_branch
        %424 = sbr.rel (%p422) target = $region44
      $region43: #{student_slimmed_fps_forward.2} parent=39 // pred_region
        %s425 = smul.u32 16, %s15
        %p426 = scmp.lt.s32.totalorder %s425, 63
        %s427 = scalar_select %p426, %s425, 63
        %s428 = smul.addr %s427, 8
        %s429 = scalar_lea.vmem %s3, %s428
      $region44: #{student_slimmed_fps_forward.2} parent=39 // pred_fallthru
        _
    $region40: #{student_slimmed_fps_forward.2} parent=5 // pred_fallthru
      _
  $region6: #{student_slimmed_fps_forward.2} parent=0 // loop_footer
    %s13 = sadd.s32 1, %s9
  $region7: #{student_slimmed_fps_forward.2} parent=0 // loop_footer_branch
    %8 = sbr.rel target = $region3
  $region8: #{student_slimmed_fps_forward.2} parent=0 // loop_exit
    _

// kernel: student_slimmed_fps_forward.3
$region0: #{student_slimmed_fps_forward.3}
  #allocation0 [shape = 'u32[]', space=smem, size = 0x4, offset = 0x4, fixed_abs, tag = 'smem constant byte address 0x4 - core index']
  #allocation1 [shape = 'u32[144,128]{1,0:T(1,128)}', space=vmem, size = 0x12000, scoped, tag = 'internal scratch']
  #allocation2 [shape = 'bf16[128,64]{1,0:T(16,128)(2,1)}', space=vmem, size = 0x8000, scoped, tag = 'scratch operand']
  %s0 = inlined_call_operand.vmem [shape: bf16[128,288], index: 0, kind: input, shape index: {}]
  %s1 = inlined_call_operand.vmem [shape: bf16[288,64], index: 1, kind: input, shape index: {}]
  %s2 = inlined_call_operand.vmem [shape: f32[1,64], index: 2, kind: input, shape index: {}]
  %s3 = inlined_call_operand.vmem [shape: bf16[64,2048], index: 3, kind: input, shape index: {}]
  %s4 = inlined_call_operand.vmem [shape: f32[1,2048], index: 4, kind: input, shape index: {}]
  %s5 = inlined_call_operand.vmem [shape: bf16[2048,256], index: 5, kind: input, shape index: {}]
  %s6 = inlined_call_operand.vmem [shape: f32[1,256], index: 6, kind: input, shape index: {}]
  %s7 = inlined_call_operand.hbm [shape: f32[128,2048], index: 7, kind: output, shape index: {0}]
  %s8 = inlined_call_operand.hbm [shape: f32[2,256], index: 8, kind: output, shape index: {1}]
  %9 = xla_tuple %s7, %s8
  %s10 = sld [smem:[#allocation0]]
  $region96: #{student_slimmed_fps_forward.3} parent=0
    _
  %s12 = ssub.s32 1, %s10
  %s13 = scalar_select 0, %s12, %s10
  $region1: #{student_slimmed_fps_forward.3} parent=0
    #allocation3 [shape = 'u8[131072]{0}', space=vmem, size = 0x20000, scoped, tag = 'input window, operand 3']
    #allocation4 [shape = 'u8[524288]{0}', space=vmem, size = 0x80000, scoped, tag = 'output window, operand 0']
    #allocation5 [shape = 's32[2]{0}', space=sflag, size = 0x8, scoped, tag = 'scoped memory for student_slimmed_fps_forward.3']
    #allocation6 [shape = 'u8[2048]{0}', space=vmem, size = 0x800, scoped, tag = 'output window, operand 1, single buffered']
    #allocation7 [shape = 's32[1]{0}', space=sflag, size = 0x4, scoped, tag = 'scoped memory for student_slimmed_fps_forward.3']
    %14 = vsyncpa [#allocation5], 0
    %s15 = scalar_lea.sflag [#allocation5], 1
    %16 = vsyncpa %s15, 0
    %17 = vsyncpa [#allocation7], 0
    loop: start=0, step=1, limit=6
    $region2: #{student_slimmed_fps_forward.3} parent=1 // loop_pre_header
      _
    $region3: #{student_slimmed_fps_forward.3} parent=1 // loop_header
      %s19 = sphi 0, %s23
      %p20 = scmp.ge.s32.totalorder %s19, 6
      %s27 = sphi 0, %s27
      %s29 = sphi 0, %s27
      %s30 = sphi 0, %s29
      %s44 = sphi 0, %s30
      %s48 = sphi 0, %s48
      %s50 = sphi 0, %s48
      %s51 = sphi 0, %s50
      %s65 = sphi 0, %s51
      %s69 = sphi 0, %s69
      %s71 = sphi 0, %s69
      %s72 = sphi 0, %s71
      %s86 = sphi 0, %s72
      %s92 = sphi 0, %s94
      %s95 = sphi 0, %s92
      %s96 = sphi 0, %s95
      %s112 = sphi 0, %s96
      %s118 = sphi 0, %s120
      %s121 = sphi 0, %s118
      %s122 = sphi 0, %s121
      %s138 = sphi 0, %s122
      %s144 = sphi 0, %s146
      %s147 = sphi 0, %s144
      %s148 = sphi 0, %s147
      %s164 = sphi 0, %s148
      %s168 = sphi 0, %s168
      %s170 = sphi 0, %s168
      %s171 = sphi 0, %s170
      %s185 = sphi 0, %s171
      %s191 = sphi 0, %s193
      %s194 = sphi 0, %s191
      %s195 = sphi 0, %s194
      %s211 = sphi 0, %s195
      %s215 = sphi 0, %s215
      %s217 = sphi 0, %s215
      %s218 = sphi 0, %s217
      %s232 = sphi 0, %s218
    $region4: #{student_slimmed_fps_forward.3} parent=1 // loop_header_branch
      %22 = sbr.rel (%p20) target = $region8
    $region5: #{student_slimmed_fps_forward.3} parent=1 // loop_body
      %s24 = ssub.s32 %s19, 1
      %s25 = ssub.s32 %s19, 2
      %s26 = sadd.s32 %s19, 1
      %s28 = sadd.s32 %s27, 1
      %p31 = scmp.eq.s32.totalorder %s19, 3
      %p32 = scmp.ne.s32.totalorder %s27, %s29
      %p33 = scmp.eq.s32.totalorder %s19, 0
      %p34 = por %p32, %p33
      %p35 = scmp.ne.s32.totalorder %s27, %s29
      %p36 = scmp.eq.s32.totalorder %s24, 3
      %p37 = por %p35, %p36
      %p38 = scmp.ne.s32.totalorder %s29, %s30
      %p39 = scmp.eq.s32.totalorder %s24, 0
      %p40 = por %p38, %p39
      %p41 = scmp.ne.s32.totalorder %s29, %s30
      %p42 = scmp.eq.s32.totalorder %s25, 3
      %p43 = por %p41, %p42
      %p45 = scmp.ne.s32.totalorder %s30, %s44
      %p46 = scmp.eq.s32.totalorder %s25, 0
      %p47 = por %p45, %p46
      %s49 = sadd.s32 %s48, 1
      %p52 = scmp.eq.s32.totalorder %s19, 3
      %p53 = scmp.ne.s32.totalorder %s48, %s50
      %p54 = scmp.eq.s32.totalorder %s19, 0
      %p55 = por %p53, %p54
      %p56 = scmp.ne.s32.totalorder %s48, %s50
      %p57 = scmp.eq.s32.totalorder %s24, 3
      %p58 = por %p56, %p57
      %p59 = scmp.ne.s32.totalorder %s50, %s51
      %p60 = scmp.eq.s32.totalorder %s24, 0
      %p61 = por %p59, %p60
      %p62 = scmp.ne.s32.totalorder %s50, %s51
      %p63 = scmp.eq.s32.totalorder %s25, 3
      %p64 = por %p62, %p63
      %p66 = scmp.ne.s32.totalorder %s51, %s65
      %p67 = scmp.eq.s32.totalorder %s25, 0
      %p68 = por %p66, %p67
      %s70 = sadd.s32 %s69, 1
      %p73 = scmp.eq.s32.totalorder %s19, 3
      %p74 = scmp.ne.s32.totalorder %s69, %s71
      %p75 = scmp.eq.s32.totalorder %s19, 0
      %p76 = por %p74, %p75
      %p77 = scmp.ne.s32.totalorder %s69, %s71
      %p78 = scmp.eq.s32.totalorder %s24, 3
      %p79 = por %p77, %p78
      %p80 = scmp.ne.s32.totalorder %s71, %s72
      %p81 = scmp.eq.s32.totalorder %s24, 0
      %p82 = por %p80, %p81
      %p83 = scmp.ne.s32.totalorder %s71, %s72
      %p84 = scmp.eq.s32.totalorder %s25, 3
      %p85 = por %p83, %p84
      %p87 = scmp.ne.s32.totalorder %s72, %s86
      %p88 = scmp.eq.s32.totalorder %s25, 0
      %p89 = por %p87, %p88
      %s90 = ssub.s32 %s19, %s26
      %p91 = scmp.eq.s32.totalorder %s90, 0
      %s93 = sadd.s32 %s92, 1
      %s94 = scalar_select %p91, %s92, %s93
      %p97 = pneg %p91
      %p98 = scmp.eq.s32.totalorder %s19, 3
      %p99 = por %p97, %p98
      %p100 = scmp.ne.s32.totalorder %s92, %s95
      %p101 = scmp.eq.s32.totalorder %s19, 0
      %p102 = por %p100, %p101
      %p103 = scmp.ne.s32.totalorder %s92, %s95
      %p104 = scmp.eq.s32.totalorder %s24, 3
      %p105 = por %p103, %p104
      %p106 = scmp.ne.s32.totalorder %s95, %s96
      %p107 = scmp.eq.s32.totalorder %s24, 0
      %p108 = por %p106, %p107
      %p109 = scmp.ne.s32.totalorder %s95, %s96
      %p110 = scmp.eq.s32.totalorder %s25, 3
      %p111 = por %p109, %p110
      %p113 = scmp.ne.s32.totalorder %s96, %s112
      %p114 = scmp.eq.s32.totalorder %s25, 0
      %p115 = por %p113, %p114
      %s116 = ssub.s32 %s19, %s26
      %p117 = scmp.eq.s32.totalorder %s116, 0
      %s119 = sadd.s32 %s118, 1
      %s120 = scalar_select %p117, %s118, %s119
      %p123 = pneg %p117
      %p124 = scmp.eq.s32.totalorder %s19, 3
      %p125 = por %p123, %p124
      %p126 = scmp.ne.s32.totalorder %s118, %s121
      %p127 = scmp.eq.s32.totalorder %s19, 0
      %p128 = por %p126, %p127
      %p129 = scmp.ne.s32.totalorder %s118, %s121
      %p130 = scmp.eq.s32.totalorder %s24, 3
      %p131 = por %p129, %p130
      %p132 = scmp.ne.s32.totalorder %s121, %s122
      %p133 = scmp.eq.s32.totalorder %s24, 0
      %p134 = por %p132, %p133
      %p135 = scmp.ne.s32.totalorder %s121, %s122
      %p136 = scmp.eq.s32.totalorder %s25, 3
      %p137 = por %p135, %p136
      %p139 = scmp.ne.s32.totalorder %s122, %s138
      %p140 = scmp.eq.s32.totalorder %s25, 0
      %p141 = por %p139, %p140
      %s142 = ssub.s32 %s19, %s26
      %p143 = scmp.eq.s32.totalorder %s142, 0
      %s145 = sadd.s32 %s144, 1
      %s146 = scalar_select %p143, %s144, %s145
      %p149 = pneg %p143
      %p150 = scmp.eq.s32.totalorder %s19, 3
      %p151 = por %p149, %p150
      %p152 = scmp.ne.s32.totalorder %s144, %s147
      %p153 = scmp.eq.s32.totalorder %s19, 0
      %p154 = por %p152, %p153
      %p155 = scmp.ne.s32.totalorder %s144, %s147
      %p156 = scmp.eq.s32.totalorder %s24, 3
      %p157 = por %p155, %p156
      %p158 = scmp.ne.s32.totalorder %s147, %s148
      %p159 = scmp.eq.s32.totalorder %s24, 0
      %p160 = por %p158, %p159
      %p161 = scmp.ne.s32.totalorder %s147, %s148
      %p162 = scmp.eq.s32.totalorder %s25, 3
      %p163 = por %p161, %p162
      %p165 = scmp.ne.s32.totalorder %s148, %s164
      %p166 = scmp.eq.s32.totalorder %s25, 0
      %p167 = por %p165, %p166
      %s169 = sadd.s32 %s168, 1
      %p172 = scmp.eq.s32.totalorder %s19, 3
      %p173 = scmp.ne.s32.totalorder %s168, %s170
      %p174 = scmp.eq.s32.totalorder %s19, 0
      %p175 = por %p173, %p174
      %p176 = scmp.ne.s32.totalorder %s168, %s170
      %p177 = scmp.eq.s32.totalorder %s24, 3
      %p178 = por %p176, %p177
      %p179 = scmp.ne.s32.totalorder %s170, %s171
      %p180 = scmp.eq.s32.totalorder %s24, 0
      %p181 = por %p179, %p180
      %p182 = scmp.ne.s32.totalorder %s170, %s171
      %p183 = scmp.eq.s32.totalorder %s25, 3
      %p184 = por %p182, %p183
      %p186 = scmp.ne.s32.totalorder %s171, %s185
      %p187 = scmp.eq.s32.totalorder %s25, 0
      %p188 = por %p186, %p187
      %s189 = ssub.s32 %s19, %s26
      %p190 = scmp.eq.s32.totalorder %s189, 0
      %s192 = sadd.s32 %s191, 1
      %s193 = scalar_select %p190, %s191, %s192
      %p196 = pneg %p190
      %p197 = scmp.eq.s32.totalorder %s19, 3
      %p198 = por %p196, %p197
      %p199 = scmp.ne.s32.totalorder %s191, %s194
      %p200 = scmp.eq.s32.totalorder %s19, 0
      %p201 = por %p199, %p200
      %p202 = scmp.ne.s32.totalorder %s191, %s194
      %p203 = scmp.eq.s32.totalorder %s24, 3
      %p204 = por %p202, %p203
      %p205 = scmp.ne.s32.totalorder %s194, %s195
      %p206 = scmp.eq.s32.totalorder %s24, 0
      %p207 = por %p205, %p206
      %p208 = scmp.ne.s32.totalorder %s194, %s195
      %p209 = scmp.eq.s32.totalorder %s25, 3
      %p210 = por %p208, %p209
      %p212 = scmp.ne.s32.totalorder %s195, %s211
      %p213 = scmp.eq.s32.totalorder %s25, 0
      %p214 = por %p212, %p213
      %s216 = sadd.s32 %s215, 1
      %p219 = scmp.eq.s32.totalorder %s19, 3
      %p220 = scmp.ne.s32.totalorder %s215, %s217
      %p221 = scmp.eq.s32.totalorder %s19, 0
      %p222 = por %p220, %p221
      %p223 = scmp.ne.s32.totalorder %s215, %s217
      %p224 = scmp.eq.s32.totalorder %s24, 3
      %p225 = por %p223, %p224
      %p226 = scmp.ne.s32.totalorder %s217, %s218
      %p227 = scmp.eq.s32.totalorder %s24, 0
      %p228 = por %p226, %p227
      %p229 = scmp.ne.s32.totalorder %s217, %s218
      %p230 = scmp.eq.s32.totalorder %s25, 3
      %p231 = por %p229, %p230
      %p233 = scmp.ne.s32.totalorder %s218, %s232
      %p234 = scmp.eq.s32.totalorder %s25, 0
      %p235 = por %p233, %p234
      %p236 = scmp.le.s32.totalorder 1, %s19
      %p237 = scmp.lt.s32.totalorder %s19, 5
      %p238 = pnand %p236, %p237
      %p239 = pneg %p238
      // Predicated region
      $region9: #{student_slimmed_fps_forward.3} parent=5 // pred_check
        _
      $region10: #{student_slimmed_fps_forward.3} parent=5 // pred_check_branch
        %241 = sbr.rel (%p238) target = $region12
      $region11: #{student_slimmed_fps_forward.3} parent=5 // pred_region
        %s242 = ssub.s32 %s19, 1
        // Predicated region
        $region13: #{student_slimmed_fps_forward.3} parent=11 // pred_check
          %p243 = pneg %p40
        $region14: #{student_slimmed_fps_forward.3} parent=11 // pred_check_branch
          %245 = sbr.rel (%p243) target = $region16
        $region15: #{student_slimmed_fps_forward.3} parent=11 // pred_region
          _
        $region16: #{student_slimmed_fps_forward.3} parent=11 // pred_fallthru
          _
        // Predicated region
        $region17: #{student_slimmed_fps_forward.3} parent=11 // pred_check
          %p246 = pneg %p61
        $region18: #{student_slimmed_fps_forward.3} parent=11 // pred_check_branch
          %248 = sbr.rel (%p246) target = $region20
        $region19: #{student_slimmed_fps_forward.3} parent=11 // pred_region
          _
        $region20: #{student_slimmed_fps_forward.3} parent=11 // pred_fallthru
          _
        // Predicated region
        $region21: #{student_slimmed_fps_forward.3} parent=11 // pred_check
          %p249 = pneg %p82
        $region22: #{student_slimmed_fps_forward.3} parent=11 // pred_check_branch
          %251 = sbr.rel (%p249) target = $region24
        $region23: #{student_slimmed_fps_forward.3} parent=11 // pred_region
          _
        $region24: #{student_slimmed_fps_forward.3} parent=11 // pred_fallthru
          _
        // Predicated region
        $region25: #{student_slimmed_fps_forward.3} parent=11 // pred_check
          %p252 = pneg %p181
        $region26: #{student_slimmed_fps_forward.3} parent=11 // pred_check_branch
          %254 = sbr.rel (%p252) target = $region28
        $region27: #{student_slimmed_fps_forward.3} parent=11 // pred_region
          _
        $region28: #{student_slimmed_fps_forward.3} parent=11 // pred_fallthru
          _
      $region12: #{student_slimmed_fps_forward.3} parent=5 // pred_fallthru
        _
      %p255 = scmp.lt.s32.totalorder %s19, 4
      // Predicated region
      $region29: #{student_slimmed_fps_forward.3} parent=5 // pred_check
        %p256 = pneg %p255
      $region30: #{student_slimmed_fps_forward.3} parent=5 // pred_check_branch
        %258 = sbr.rel (%p256) target = $region32
      $region31: #{student_slimmed_fps_forward.3} parent=5 // pred_region
        // Predicated region
        $region33: #{student_slimmed_fps_forward.3} parent=31 // pred_check
          %p259 = pneg %p102
        $region34: #{student_slimmed_fps_forward.3} parent=31 // pred_check_branch
          %261 = sbr.rel (%p259) target = $region36
        $region35: #{student_slimmed_fps_forward.3} parent=31 // pred_region
          %s262 = sand.u32 %s92, 1
          %s263 = sand.u32 %s92, 1
          %s264 = smul.addr %s263, 128
          %s265 = scalar_lea.vmem [#allocation3], %s264
          %s266 = smul.u32 4, %s19
          %s267 = smul.addr %s266, 4
          %s268 = scalar_lea.vmem %s3, %s267
          // Predicated region
          $region37: #{student_slimmed_fps_forward.3} parent=35 // pred_check
            _
          $region38: #{student_slimmed_fps_forward.3} parent=35 // pred_check_branch
            %270 = sbr.rel (0) target = $region40
          $region39: #{student_slimmed_fps_forward.3} parent=35 // pred_region
            // Predicated region
            $region41: #{student_slimmed_fps_forward.3} parent=39 // pred_check
              _
            $region42: #{student_slimmed_fps_forward.3} parent=39 // pred_check_branch
              %272 = sbr.rel (0) target = $region44
            $region43: #{student_slimmed_fps_forward.3} parent=39 // pred_region
              loop: start=0, step=1, limit=1
              $region45: #{student_slimmed_fps_forward.3} parent=43 // loop_pre_header
                _
              $region46: #{student_slimmed_fps_forward.3} parent=43 // loop_header
                %s274 = sphi 0, %s278
                %p275 = scmp.ge.s32.totalorder %s274, 1
                %s279 = sphi %s268, %s268
                %s280 = sphi %s265, %s265
              $region47: #{student_slimmed_fps_forward.3} parent=43 // loop_header_branch
                %277 = sbr.rel (%p275) target = $region51
              $region48: #{student_slimmed_fps_forward.3} parent=43 // loop_body
                %v281 = vld [vmem:[%s279] sm:$0xff]
                %282 = vst [vmem:[%s280] sm:$0xff] %v281
                %v283 = vld [vmem:[%s279 + $0x8] sm:$0xff]
                %284 = vst [vmem:[%s280 + $0x8] sm:$0xff] %v283
                %v285 = vld [vmem:[%s279 + $0x40] sm:$0xff]
                %286 = vst [vmem:[%s280 + $0x10] sm:$0xff] %v285
                %v287 = vld [vmem:[%s279 + $0x48] sm:$0xff]
                %288 = vst [vmem:[%s280 + $0x18] sm:$0xff] %v287
                %v289 = vld [vmem:[%s279 + $0x80] sm:$0xff]
                %290 = vst [vmem:[%s280 + $0x20] sm:$0xff] %v289
                %v291 = vld [vmem:[%s279 + $0x88] sm:$0xff]
                %292 = vst [vmem:[%s280 + $0x28] sm:$0xff] %v291
                %v293 = vld [vmem:[%s279 + $0xc0] sm:$0xff]
                %294 = vst [vmem:[%s280 + $0x30] sm:$0xff] %v293
                %v295 = vld [vmem:[%s279 + $0xc8] sm:$0xff]
                %296 = vst [vmem:[%s280 + $0x38] sm:$0xff] %v295
                %v297 = vld [vmem:[%s279 + $0x100] sm:$0xff]
                %298 = vst [vmem:[%s280 + $0x40] sm:$0xff] %v297
                %v299 = vld [vmem:[%s279 + $0x108] sm:$0xff]
                %300 = vst [vmem:[%s280 + $0x48] sm:$0xff] %v299
                %v301 = vld [vmem:[%s279 + $0x140] sm:$0xff]
                %302 = vst [vmem:[%s280 + $0x50] sm:$0xff] %v301
                %v303 = vld [vmem:[%s279 + $0x148] sm:$0xff]
                %304 = vst [vmem:[%s280 + $0x58] sm:$0xff] %v303
                %v305 = vld [vmem:[%s279 + $0x180] sm:$0xff]
                %306 = vst [vmem:[%s280 + $0x60] sm:$0xff] %v305
                %v307 = vld [vmem:[%s279 + $0x188] sm:$0xff]
                %308 = vst [vmem:[%s280 + $0x68] sm:$0xff] %v307
                %v309 = vld [vmem:[%s279 + $0x1c0] sm:$0xff]
                %310 = vst [vmem:[%s280 + $0x70] sm:$0xff] %v309
                %v311 = vld [vmem:[%s279 + $0x1c8] sm:$0xff]
                %312 = vst [vmem:[%s280 + $0x78] sm:$0xff] %v311
              $region49: #{student_slimmed_fps_forward.3} parent=43 // loop_footer
                %s278 = sadd.s32 1, %s274
              $region50: #{student_slimmed_fps_forward.3} parent=43 // loop_footer_branch
                %273 = sbr.rel target = $region46
              $region51: #{student_slimmed_fps_forward.3} parent=43 // loop_exit
                _
            $region44: #{student_slimmed_fps_forward.3} parent=39 // pred_fallthru
              _
            // Predicated region
            $region52: #{student_slimmed_fps_forward.3} parent=39 // pred_check
              _
            $region53: #{student_slimmed_fps_forward.3} parent=39 // pred_check_branch
              %314 = sbr.rel target = $region55
            $region54: #{student_slimmed_fps_forward.3} parent=39 // pred_region
              _
            $region55: #{student_slimmed_fps_forward.3} parent=39 // pred_fallthru
              _
          $region40: #{student_slimmed_fps_forward.3} parent=35 // pred_fallthru
            _
          %315 = vnop
        $region36: #{student_slimmed_fps_forward.3} parent=31 // pred_fallthru
          _
        // Predicated region
        $region56: #{student_slimmed_fps_forward.3} parent=31 // pred_check
          %p316 = pneg %p128
        $region57: #{student_slimmed_fps_forward.3} parent=31 // pred_check_branch
          %318 = sbr.rel (%p316) target = $region59
        $region58: #{student_slimmed_fps_forward.3} parent=31 // pred_region
          %s319 = smul.u32 4, %s19
          %p320 = scmp.lt.s32.totalorder %s319, 15
          %s321 = scalar_select %p320, %s319, 15
          %s322 = scalar_lea.vmem %s4, %s321
          %s323 = smul.u32 4, %s19
        $region59: #{student_slimmed_fps_forward.3} parent=31 // pred_fallthru
          _
        // Predicated region
        $region60: #{student_slimmed_fps_forward.3} parent=31 // pred_check
          %p324 = pneg %p154
        $region61: #{student_slimmed_fps_forward.3} parent=31 // pred_check_branch
          %326 = sbr.rel (%p324) target = $region63
        $region62: #{student_slimmed_fps_forward.3} parent=31 // pred_region
          %s327 = smul.u32 64, %s19
          %p328 = scmp.lt.s32.totalorder %s327, 255
          %s329 = scalar_select %p328, %s327, 255
          %s330 = smul.addr %s329, 2
          %s331 = smul.addr %s330, 4
          %s332 = scalar_lea.vmem %s5, %s331
          %s333 = smul.u32 64, %s19
        $region63: #{student_slimmed_fps_forward.3} parent=31 // pred_fallthru
          _
      $region32: #{student_slimmed_fps_forward.3} parent=5 // pred_fallthru
        _
      %p334 = scmp.le.s32.totalorder 1, %s19
      %p335 = scmp.lt.s32.totalorder %s19, 5
      %p336 = pnand %p334, %p335
      %p337 = pneg %p336
      // Predicated region
      $region64: #{student_slimmed_fps_forward.3} parent=5 // pred_check
        _
      $region65: #{student_slimmed_fps_forward.3} parent=5 // pred_check_branch
        %339 = sbr.rel (%p336) target = $region67
      $region66: #{student_slimmed_fps_forward.3} parent=5 // pred_region
        %s340 = ssub.s32 %s19, 1
        %s341 = sand.u32 %s95, 1
        %s342 = sand.u32 %s95, 1
        %s343 = smul.addr %s342, 128
        %s344 = scalar_lea.vmem [#allocation3], %s343
        // Predicated region
        $region68: #{student_slimmed_fps_forward.3} parent=66 // pred_check
          %p345 = pneg %p108
        $region69: #{student_slimmed_fps_forward.3} parent=66 // pred_check_branch
          %347 = sbr.rel (%p345) target = $region71
        $region70: #{student_slimmed_fps_forward.3} parent=66 // pred_region
          _
        $region71: #{student_slimmed_fps_forward.3} parent=66 // pred_fallthru
          _
        %p348 = pneg %p40
        %p349 = pneg %p37
        %p350 = pneg %p61
        %p351 = pneg %p58
        %p352 = pneg %p82
        %p353 = pneg %p79
        %s354 = sand.u32 %s95, 1
        %s355 = sand.u32 %s95, 1
        %s356 = smul.addr %s355, 128
        %s357 = scalar_lea.vmem [#allocation3], %s356
        %p358 = pneg %p108
        %p359 = pneg %p105
        %s360 = smul.u32 4, %s24
        %p361 = scmp.lt.s32.totalorder %s360, 15
        %s362 = scalar_select %p361, %s360, 15
        %s363 = scalar_lea.vmem %s4, %s362
        %p364 = pneg %p134
        %p365 = pneg %p131
        %s366 = smul.u32 64, %s24
        %p367 = scmp.lt.s32.totalorder %s366, 255
        %s368 = scalar_select %p367, %s366, 255
        %s369 = smul.addr %s368, 2
        %s370 = smul.addr %s369, 4
        %s371 = scalar_lea.vmem %s5, %s370
        %p372 = pneg %p160
        %p373 = pneg %p157
        %p374 = pneg %p181
        %p375 = pneg %p178
        %p376 = pneg %p207
        %p377 = pneg %p204
        %s378 = sand.u32 %s194, 1
        %s379 = scalar_lea.sflag [#allocation5], %s378
        %s380 = sand.u32 %s194, 1
        %s381 = smul.addr %s380, 512
        %s382 = scalar_lea.vmem [#allocation4], %s381
        %p383 = pneg %p228
        %p384 = pneg %p225
        %s385 = smul.u32 4, %s24
        %s386 = smul.u32 4, %s24
        %p387 = scmp.lt.s32.totalorder %s386, 15
        %s388 = scalar_select %p387, %s386, 15
        %s389 = scalar_lea.vmem %s4, %s388
        %s390 = smul.u32 4, %s24
        %s391 = smul.u32 64, %s24
        %p392 = scmp.lt.s32.totalorder %s391, 255
        %s393 = scalar_select %p392, %s391, 255
        %s394 = smul.addr %s393, 2
        %s395 = smul.addr %s394, 4
        %s396 = scalar_lea.vmem %s5, %s395
        %s397 = smul.u32 64, %s24
        %s398 = smul.u32 4, %s24
        %p400 = scmp.eq.s32.totalorder %s24, 0
        // Predicated region
        $region72: #{student_slimmed_fps_forward.3} parent=66 // pred_check
          %p401 = pneg %p400
        $region73: #{student_slimmed_fps_forward.3} parent=66 // pred_check_branch
          %403 = sbr.rel (%p401) target = $region75
        $region74: #{student_slimmed_fps_forward.3} parent=66 // pred_region
          %v404 = vld [vmem:[%s0] sm:$0xff]
          %v405 = vld [vmem:[%s0 + $0x8] sm:$0xf]
          %v406 = vld [vmem:[%s0 + $0xc] sm:$0xff]
          %v407 = vld [vmem:[%s0 + $0x14] sm:$0xf]
          %v408 = vld [vmem:[%s0 + $0x18] sm:$0xff]
          %v409 = vld [vmem:[%s0 + $0x20] sm:$0xf]
          %v410 = vld [vmem:[%s0 + $0x24] sm:$0xff]
          %v411 = vld [vmem:[%s0 + $0x2c] sm:$0xf]
          %v412 = vld [vmem:[%s0 + $0x30] sm:$0xff]
          %v413 = vld [vmem:[%s0 + $0x38] sm:$0xf]
          %v414 = vld [vmem:[%s0 + $0x3c] sm:$0xff]
          %v415 = vld [vmem:[%s0 + $0x44] sm:$0xf]
          %v416 = vld [vmem:[%s0 + $0x48] sm:$0xff]
          %v417 = vld [vmem:[%s0 + $0x50] sm:$0xf]
          %v418 = vld [vmem:[%s0 + $0x54] sm:$0xff]
          %v419 = vld [vmem:[%s0 + $0x5c] sm:$0xf]
          %v420 = vld [vmem:[%s0 + $0x60] sm:$0xff]
          %v421 = vld [vmem:[%s0 + $0x68] sm:$0xf]
          %v422 = vld [vmem:[%s0 + $0x6c] sm:$0xff]
          %v423 = vld [vmem:[%s0 + $0x74] sm:$0xf]
          %v424 = vld [vmem:[%s0 + $0x78] sm:$0xff]
          %v425 = vld [vmem:[%s0 + $0x80] sm:$0xf]
          %v426 = vld [vmem:[%s0 + $0x84] sm:$0xff]
          %v427 = vld [vmem:[%s0 + $0x8c] sm:$0xf]
          %v428 = vld [vmem:[%s0 + $0x90] sm:$0xff]
          %v429 = vld [vmem:[%s0 + $0x98] sm:$0xf]
          %v430 = vld [vmem:[%s0 + $0x9c] sm:$0xff]
          %v431 = vld [vmem:[%s0 + $0xa4] sm:$0xf]
          %v432 = vld [vmem:[%s0 + $0xa8] sm:$0xff]
          %v433 = vld [vmem:[%s0 + $0xb0] sm:$0xf]
          %v434 = vld [vmem:[%s0 + $0xb4] sm:$0xff]
          %v435 = vld [vmem:[%s0 + $0xbc] sm:$0xf]
          %v436 = vld [vmem:[%s1] sm:$0xf]
          %v437 = vld [vmem:[%s1 + $0x4] sm:$0xf]
          %v438 = vld [vmem:[%s1 + $0x8] sm:$0xf]
          %v439 = vld [vmem:[%s1 + $0xc] sm:$0xf]
          %v440 = vld [vmem:[%s1 + $0x10] sm:$0xf]
          %v441 = vld [vmem:[%s1 + $0x14] sm:$0xf]
          %v442 = vld [vmem:[%s1 + $0x18] sm:$0xf]
          %v443 = vld [vmem:[%s1 + $0x1c] sm:$0xf]
          %v444 = vld [vmem:[%s1 + $0x20] sm:$0xf]
          %v445 = vld [vmem:[%s1 + $0x24] sm:$0xf]
          %v446 = vld [vmem:[%s1 + $0x28] sm:$0xf]
          %v447 = vld [vmem:[%s1 + $0x2c] sm:$0xf]
          %v448 = vld [vmem:[%s1 + $0x30] sm:$0xf]
          %v449 = vld [vmem:[%s1 + $0x34] sm:$0xf]
          %v450 = vld [vmem:[%s1 + $0x38] sm:$0xf]
          %v451 = vld [vmem:[%s1 + $0x3c] sm:$0xf]
          %v452 = vld [vmem:[%s1 + $0x40] sm:$0xf]
          %v453 = vld [vmem:[%s1 + $0x44] sm:$0xf]
          %v454 = vld [vmem:[%s1 + $0x48] sm:$0xf]
          %v455 = vld [vmem:[%s1 + $0x4c] sm:$0xf]
          %v456 = vld [vmem:[%s1 + $0x50] sm:$0xf]
          %v457 = vld [vmem:[%s1 + $0x54] sm:$0xf]
          %v458 = vld [vmem:[%s1 + $0x58] sm:$0xf]
          %v459 = vld [vmem:[%s1 + $0x5c] sm:$0xf]
          %v460 = vld [vmem:[%s1 + $0x60] sm:$0xf]
          %v461 = vld [vmem:[%s1 + $0x64] sm:$0xf]
          %v462 = vld [vmem:[%s1 + $0x68] sm:$0xf]
          %v463 = vld [vmem:[%s1 + $0x6c] sm:$0xf]
          %v464 = vld [vmem:[%s1 + $0x70] sm:$0xf]
          %v465 = vld [vmem:[%s1 + $0x74] sm:$0xf]
          %v466 = vld [vmem:[%s1 + $0x78] sm:$0xf]
          %v467 = vld [vmem:[%s1 + $0x7c] sm:$0xf]
          %v468 = vld [vmem:[%s1 + $0x80] sm:$0xf]
          %v469 = vld [vmem:[%s1 + $0x84] sm:$0xf]
          %v470 = vld [vmem:[%s1 + $0x88] sm:$0xf]
          %v471 = vld [vmem:[%s1 + $0x8c] sm:$0xf]
          %v472 = vld [vmem:[%s2] sm:$0x1]
          %v474 = vlaneseq
          %v475 = vshrl.u32 %v474, 7
          %v476 = vsub.s32 0, %v475
          %v477 = vrot.slane %v472, %v476
          %v511 = vunpack.c.l.b16 %v404
          %v512 = vunpack.c.h.b16 %v404
          %v513 = vunpack.c.l.b16 %v405
          %v514 = vunpack.c.l.b16 %v406
          %v515 = vunpack.c.h.b16 %v406
          %v516 = vunpack.c.l.b16 %v407
          %v517 = vunpack.c.l.b16 %v408
          %v518 = vunpack.c.h.b16 %v408
          %v519 = vunpack.c.l.b16 %v409
          %v520 = vunpack.c.l.b16 %v410
          %v521 = vunpack.c.h.b16 %v410
          %v522 = vunpack.c.l.b16 %v411
          %v523 = vunpack.c.l.b16 %v412
          %v524 = vunpack.c.h.b16 %v412
          %v525 = vunpack.c.l.b16 %v413
          %v526 = vunpack.c.l.b16 %v414
          %v527 = vunpack.c.h.b16 %v414
          %v528 = vunpack.c.l.b16 %v415
          %v529 = vunpack.c.l.b16 %v416
          %v530 = vunpack.c.h.b16 %v416
          %v531 = vunpack.c.l.b16 %v417
          %v532 = vunpack.c.l.b16 %v418
          %v533 = vunpack.c.h.b16 %v418
          %v534 = vunpack.c.l.b16 %v419
          %v535 = vunpack.c.l.b16 %v420
          %v536 = vunpack.c.h.b16 %v420
          %v537 = vunpack.c.l.b16 %v421
          %v538 = vunpack.c.l.b16 %v422
          %v539 = vunpack.c.h.b16 %v422
          %v540 = vunpack.c.l.b16 %v423
          %v541 = vunpack.c.l.b16 %v424
          %v542 = vunpack.c.h.b16 %v424
          %v543 = vunpack.c.l.b16 %v425
          %v544 = vunpack.c.l.b16 %v426
          %v545 = vunpack.c.h.b16 %v426
          %v546 = vunpack.c.l.b16 %v427
          %v547 = vunpack.c.l.b16 %v428
          %v548 = vunpack.c.h.b16 %v428
          %v549 = vunpack.c.l.b16 %v429
          %v550 = vunpack.c.l.b16 %v430
          %v551 = vunpack.c.h.b16 %v430
          %v552 = vunpack.c.l.b16 %v431
          %v553 = vunpack.c.l.b16 %v432
          %v554 = vunpack.c.h.b16 %v432
          %v555 = vunpack.c.l.b16 %v433
          %v556 = vunpack.c.l.b16 %v434
          %v557 = vunpack.c.h.b16 %v434
          %v558 = vunpack.c.l.b16 %v435
          %v559 = vpack.c.b16 %v514, %v511
          %v560 = vpack.c.b16 %v515, %v512
          %v561 = vpack.c.b16 %v516, %v513
          %v562 = vpack.c.b16 %v520, %v517
          %v563 = vpack.c.b16 %v521, %v518
          %v564 = vpack.c.b16 %v522, %v519
          %v565 = vpack.c.b16 %v526, %v523
          %v566 = vpack.c.b16 %v527, %v524
          %v567 = vpack.c.b16 %v528, %v525
          %v568 = vpack.c.b16 %v532, %v529
          %v569 = vpack.c.b16 %v533, %v530
          %v570 = vpack.c.b16 %v534, %v531
          %v571 = vpack.c.b16 %v538, %v535
          %v572 = vpack.c.b16 %v539, %v536
          %v573 = vpack.c.b16 %v540, %v537
          %v574 = vpack.c.b16 %v544, %v541
          %v575 = vpack.c.b16 %v545, %v542
          %v576 = vpack.c.b16 %v546, %v543
          %v577 = vpack.c.b16 %v550, %v547
          %v578 = vpack.c.b16 %v551, %v548
          %v579 = vpack.c.b16 %v552, %v549
          %v580 = vpack.c.b16 %v556, %v553
          %v581 = vpack.c.b16 %v557, %v554
          %v582 = vpack.c.b16 %v558, %v555
          %v635 = vunpack.c.l.b16 %v436
          %v636 = vunpack.c.l.b16 %v437
          %v637 = vunpack.c.l.b16 %v438
          %v638 = vunpack.c.l.b16 %v439
          %v639 = vunpack.c.l.b16 %v440
          %v640 = vunpack.c.l.b16 %v441
          %v641 = vunpack.c.l.b16 %v442
          %v642 = vunpack.c.l.b16 %v443
          %v643 = vunpack.c.l.b16 %v444
          %v644 = vunpack.c.l.b16 %v445
          %v645 = vunpack.c.l.b16 %v446
          %v646 = vunpack.c.l.b16 %v447
          %v647 = vunpack.c.l.b16 %v448
          %v648 = vunpack.c.l.b16 %v449
          %v649 = vunpack.c.l.b16 %v450
          %v650 = vunpack.c.l.b16 %v451
          %v651 = vunpack.c.l.b16 %v452
          %v652 = vunpack.c.l.b16 %v453
          %v653 = vunpack.c.l.b16 %v454
          %v654 = vunpack.c.l.b16 %v455
          %v655 = vunpack.c.l.b16 %v456
          %v656 = vunpack.c.l.b16 %v457
          %v657 = vunpack.c.l.b16 %v458
          %v658 = vunpack.c.l.b16 %v459
          %v659 = vunpack.c.l.b16 %v460
          %v660 = vunpack.c.l.b16 %v461
          %v661 = vunpack.c.l.b16 %v462
          %v662 = vunpack.c.l.b16 %v463
          %v663 = vunpack.c.l.b16 %v464
          %v664 = vunpack.c.l.b16 %v465
          %v665 = vunpack.c.l.b16 %v466
          %v666 = vunpack.c.l.b16 %v467
          %v667 = vunpack.c.l.b16 %v468
          %v668 = vunpack.c.l.b16 %v469
          %v669 = vunpack.c.l.b16 %v470
          %v670 = vunpack.c.l.b16 %v471
          %v671 = vpack.c.b16 %v636, %v635
          %v672 = vpack.c.b16 %v638, %v637
          %v673 = vpack.c.b16 %v640, %v639
          %v674 = vpack.c.b16 %v642, %v641
          %v675 = vpack.c.b16 %v644, %v643
          %v676 = vpack.c.b16 %v646, %v645
          %v677 = vpack.c.b16 %v648, %v647
          %v678 = vpack.c.b16 %v650, %v649
          %v679 = vpack.c.b16 %v652, %v651
          %v680 = vpack.c.b16 %v654, %v653
          %v681 = vpack.c.b16 %v656, %v655
          %v682 = vpack.c.b16 %v658, %v657
          %v683 = vpack.c.b16 %v660, %v659
          %v684 = vpack.c.b16 %v662, %v661
          %v685 = vpack.c.b16 %v664, %v663
          %v686 = vpack.c.b16 %v666, %v665
          %v687 = vpack.c.b16 %v668, %v667
          %v688 = vpack.c.b16 %v670, %v669
          %vm707 = vcmask 261120
          %v709 = vsel %vm707, %v561, 0
          %v712 = vsel %vm707, %v564, 0
          %v715 = vsel %vm707, %v567, 0
          %v718 = vsel %vm707, %v570, 0
          %v721 = vsel %vm707, %v573, 0
          %v724 = vsel %vm707, %v576, 0
          %v727 = vsel %vm707, %v579, 0
          %v730 = vsel %vm707, %v582, 0
          %732 = vmatprep.subr.bf16.mxu0 0
          %733 = vmatpush1.bf16.msra.mxu0 %v671
          %734 = vmatprep.subr.bf16.mxu0 0
          %735 = vmatpush1.bf16.msra.mxu0 %v672
          %736 = vmatprep.subr.bf16.mxu0 0
          %737 = vmatpush1.bf16.msra.mxu0 %v673
          %738 = vmatprep.subr.bf16.mxu0 0
          %739 = vmatpush1.bf16.msra.mxu0 %v674
          %740 = vmatprep.subr.bf16.mxu0 0
          %741 = vmatpush1.bf16.msra.mxu0 %v675
          %742 = vmatprep.subr.bf16.mxu0 0
          %743 = vmatpush1.bf16.msra.mxu0 %v676
          %744 = vmatprep.subr.bf16.mxu0 0
          %745 = vmatpush1.bf16.msra.mxu0 %v677
          %746 = vmatprep.subr.bf16.mxu0 0
          %747 = vmatpush1.bf16.msra.mxu0 %v678
          %748 = vmatprep.subr.bf16.mxu0 0
          %749 = vmatpush1.bf16.msra.mxu0 %v679
          %750 = vmatprep.subr.bf16.mxu0 0
          %751 = vmatpush1.bf16.msra.mxu0 %v680
          %752 = vmatprep.subr.bf16.mxu0 0
          %753 = vmatpush1.bf16.msra.mxu0 %v681
          %754 = vmatprep.subr.bf16.mxu0 0
          %755 = vmatpush1.bf16.msra.mxu0 %v682
          %756 = vmatprep.subr.bf16.mxu0 0
          %757 = vmatpush1.bf16.msra.mxu0 %v683
          %758 = vmatprep.subr.bf16.mxu0 0
          %759 = vmatpush1.bf16.msra.mxu0 %v684
          %760 = vmatprep.subr.bf16.mxu0 0
          %761 = vmatpush1.bf16.msra.mxu0 %v685
          %762 = vmatprep.subr.bf16.mxu0 0
          %763 = vmatpush1.bf16.msra.mxu0 %v686
          %764 = vmatprep.mubr.bf16.mxu0 %v560
          %765 = vmatmul.mubr.bf16.gmra.mrb[0].mxu0 %v559
          %v766 = vpop.f32.mrb[0].mxu0
          %v767 = vadd.f32 %v477, %v766
          %v768 = vpop.f32.mrb[0].mxu0
          %v769 = vpop.f32.mrb[0].mxu0
          %v770 = vadd.f32 %v477, %v769
          %v771 = vpop.f32.mrb[0].mxu0
          %772 = vmatprep.mubr.bf16.mxu0 %v563
          %773 = vmatmul.mubr.bf16.gmra.mrb[0].mxu0 %v562
          %v774 = vpop.f32.mrb[0].mxu0
          %v775 = vadd.f32 %v477, %v774
          %v776 = vpop.f32.mrb[0].mxu0
          %v777 = vpop.f32.mrb[0].mxu0
          %v778 = vadd.f32 %v477, %v777
          %v779 = vpop.f32.mrb[0].mxu0
          %780 = vmatprep.mubr.bf16.mxu0 %v566
          %781 = vmatmul.mubr.bf16.gmra.mrb[0].mxu0 %v565
          %v782 = vpop.f32.mrb[0].mxu0
          %v783 = vadd.f32 %v477, %v782
          %v784 = vpop.f32.mrb[0].mxu0
          %v785 = vpop.f32.mrb[0].mxu0
          %v786 = vadd.f32 %v477, %v785
          %v787 = vpop.f32.mrb[0].mxu0
          %788 = vmatprep.mubr.bf16.mxu0 %v569
          %789 = vmatmul.mubr.bf16.gmra.mrb[0].mxu0 %v568
          %v790 = vpop.f32.mrb[0].mxu0
          %v791 = vadd.f32 %v477, %v790
          %v792 = vpop.f32.mrb[0].mxu0
          %v793 = vpop.f32.mrb[0].mxu0
          %v794 = vadd.f32 %v477, %v793
          %v795 = vpop.f32.mrb[0].mxu0
          %796 = vmatprep.mubr.bf16.mxu0 %v572
          %797 = vmatmul.mubr.bf16.gmra.mrb[0].mxu0 %v571
          %v798 = vpop.f32.mrb[0].mxu0
          %v799 = vadd.f32 %v477, %v798
          %v800 = vpop.f32.mrb[0].mxu0
          %v801 = vpop.f32.mrb[0].mxu0
          %v802 = vadd.f32 %v477, %v801
          %v803 = vpop.f32.mrb[0].mxu0
          %804 = vmatprep.mubr.bf16.mxu0 %v575
          %805 = vmatmul.mubr.bf16.gmra.mrb[0].mxu0 %v574
          %v806 = vpop.f32.mrb[0].mxu0
          %v807 = vadd.f32 %v477, %v806
          %v808 = vpop.f32.mrb[0].mxu0
          %v809 = vpop.f32.mrb[0].mxu0
          %v810 = vadd.f32 %v477, %v809
          %v811 = vpop.f32.mrb[0].mxu0
          %812 = vmatprep.mubr.bf16.mxu0 %v578
          %813 = vmatmul.mubr.bf16.gmra.mrb[0].mxu0 %v577
          %v814 = vpop.f32.mrb[0].mxu0
          %v815 = vadd.f32 %v477, %v814
          %v816 = vpop.f32.mrb[0].mxu0
          %v817 = vpop.f32.mrb[0].mxu0
          %v818 = vadd.f32 %v477, %v817
          %v819 = vpop.f32.mrb[0].mxu0
          %820 = vmatprep.mubr.bf16.mxu0 %v581
          %821 = vmatmul.mubr.bf16.gmra.mrb[0].mxu0 %v580
          %v822 = vpop.f32.mrb[0].mxu0
          %v823 = vadd.f32 %v477, %v822
          %v824 = vpop.f32.mrb[0].mxu0
          %v825 = vpop.f32.mrb[0].mxu0
          %v826 = vadd.f32 %v477, %v825
          %v827 = vpop.f32.mrb[0].mxu0
          %828 = vdwg.mxu0
          %829 = vmatprep.subr.bf16.mxu0 0
          %830 = vmatpush1.bf16.msra.mxu0 %v687
          %831 = vmatprep.subr.bf16.mxu0 0
          %832 = vmatpush1.bf16.msra.mxu0 %v688
          %833 = vmatprep.subr.bf16.mxu0 0
          %834 = vmatpush1.bf16.msra.mxu0 0
          %835 = vmatprep.subr.bf16.mxu0 0
          %836 = vmatpush1.bf16.msra.mxu0 0
          %837 = vmatprep.subr.bf16.mxu0 0
          %838 = vmatpush1.bf16.msra.mxu0 0
          %839 = vmatprep.subr.bf16.mxu0 0
          %840 = vmatpush1.bf16.msra.mxu0 0
          %841 = vmatprep.subr.bf16.mxu0 0
          %842 = vmatpush1.bf16.msra.mxu0 0
          %843 = vmatprep.subr.bf16.mxu0 0
          %844 = vmatpush1.bf16.msra.mxu0 0
          %845 = vmatprep.subr.bf16.mxu0 0
          %846 = vmatpush1.bf16.msra.mxu0 0
          %847 = vmatprep.subr.bf16.mxu0 0
          %848 = vmatpush1.bf16.msra.mxu0 0
          %849 = vmatprep.subr.bf16.mxu0 0
          %850 = vmatpush1.bf16.msra.mxu0 0
          %851 = vmatprep.subr.bf16.mxu0 0
          %852 = vmatpush1.bf16.msra.mxu0 0
          %853 = vmatprep.subr.bf16.mxu0 0
          %854 = vmatpush1.bf16.msra.mxu0 0
          %855 = vmatprep.subr.bf16.mxu0 0
          %856 = vmatpush1.bf16.msra.mxu0 0
          %857 = vmatprep.subr.bf16.mxu0 0
          %858 = vmatpush1.bf16.msra.mxu0 0
          %859 = vmatprep.subr.bf16.mxu0 0
          %860 = vmatpush1.bf16.msra.mxu0 0
          %861 = vmatprep.mubr.bf16.mxu0 0
          %862 = vmatmul.mubr.bf16.gmra.mrb[0].mxu0 %v709
          %v863 = vpop.f32.mrb[0].mxu0
          %v864 = vadd.f32 %v767, %v863
          %v865 = vpop.f32.mrb[0].mxu0
          %v866 = vpop.f32.mrb[0].mxu0
          %v867 = vadd.f32 %v770, %v866
          %v868 = vpop.f32.mrb[0].mxu0
          %869 = vmatprep.mubr.bf16.mxu0 0
          %870 = vmatmul.mubr.bf16.gmra.mrb[0].mxu0 %v712
          %v871 = vpop.f32.mrb[0].mxu0
          %v872 = vadd.f32 %v775, %v871
          %v873 = vpop.f32.mrb[0].mxu0
          %v874 = vpop.f32.mrb[0].mxu0
          %v875 = vadd.f32 %v778, %v874
          %v876 = vpop.f32.mrb[0].mxu0
          %877 = vmatprep.mubr.bf16.mxu0 0
          %878 = vmatmul.mubr.bf16.gmra.mrb[0].mxu0 %v715
          %v879 = vpop.f32.mrb[0].mxu0
          %v880 = vadd.f32 %v783, %v879
          %v881 = vpop.f32.mrb[0].mxu0
          %v882 = vpop.f32.mrb[0].mxu0
          %v883 = vadd.f32 %v786, %v882
          %v884 = vpop.f32.mrb[0].mxu0
          %885 = vmatprep.mubr.bf16.mxu0 0
          %886 = vmatmul.mubr.bf16.gmra.mrb[0].mxu0 %v718
          %v887 = vpop.f32.mrb[0].mxu0
          %v888 = vadd.f32 %v791, %v887
          %v889 = vpop.f32.mrb[0].mxu0
          %v890 = vpop.f32.mrb[0].mxu0
          %v891 = vadd.f32 %v794, %v890
          %v892 = vpop.f32.mrb[0].mxu0
          %893 = vmatprep.mubr.bf16.mxu0 0
          %894 = vmatmul.mubr.bf16.gmra.mrb[0].mxu0 %v721
          %v895 = vpop.f32.mrb[0].mxu0
          %v896 = vadd.f32 %v799, %v895
          %v897 = vpop.f32.mrb[0].mxu0
          %v898 = vpop.f32.mrb[0].mxu0
          %v899 = vadd.f32 %v802, %v898
          %v900 = vpop.f32.mrb[0].mxu0
          %901 = vmatprep.mubr.bf16.mxu0 0
          %902 = vmatmul.mubr.bf16.gmra.mrb[0].mxu0 %v724
          %v903 = vpop.f32.mrb[0].mxu0
          %v904 = vadd.f32 %v807, %v903
          %v905 = vpop.f32.mrb[0].mxu0
          %v906 = vpop.f32.mrb[0].mxu0
          %v907 = vadd.f32 %v810, %v906
          %v908 = vpop.f32.mrb[0].mxu0
          %909 = vmatprep.mubr.bf16.mxu0 0
          %910 = vmatmul.mubr.bf16.gmra.mrb[0].mxu0 %v727
          %v911 = vpop.f32.mrb[0].mxu0
          %v912 = vadd.f32 %v815, %v911
          %v913 = vpop.f32.mrb[0].mxu0
          %v914 = vpop.f32.mrb[0].mxu0
          %v915 = vadd.f32 %v818, %v914
          %v916 = vpop.f32.mrb[0].mxu0
          %917 = vmatprep.mubr.bf16.mxu0 0
          %918 = vmatmul.mubr.bf16.gmra.mrb[0].mxu0 %v730
          %v919 = vpop.f32.mrb[0].mxu0
          %v920 = vadd.f32 %v823, %v919
          %v921 = vpop.f32.mrb[0].mxu0
          %v922 = vpop.f32.mrb[0].mxu0
          %v923 = vadd.f32 %v826, %v922
          %v924 = vpop.f32.mrb[0].mxu0
          %925 = vdwg.mxu0
          %v926 = vmax.f32 %v864, 0.0
          %v927 = vmax.f32 %v867, 0.0
          %v928 = vmax.f32 %v872, 0.0
          %v929 = vmax.f32 %v875, 0.0
          %v930 = vmax.f32 %v880, 0.0
          %v931 = vmax.f32 %v883, 0.0
          %v932 = vmax.f32 %v888, 0.0
          %v933 = vmax.f32 %v891, 0.0
          %v934 = vmax.f32 %v896, 0.0
          %v935 = vmax.f32 %v899, 0.0
          %v936 = vmax.f32 %v904, 0.0
          %v937 = vmax.f32 %v907, 0.0
          %v938 = vmax.f32 %v912, 0.0
          %v939 = vmax.f32 %v915, 0.0
          %v940 = vmax.f32 %v920, 0.0
          %v941 = vmax.f32 %v923, 0.0
          %v942 = vpack.c.bf16 %v927, %v926
          %v943 = vpack.c.bf16 %v929, %v928
          %v944 = vpack.c.bf16 %v931, %v930
          %v945 = vpack.c.bf16 %v933, %v932
          %v946 = vpack.c.bf16 %v935, %v934
          %v947 = vpack.c.bf16 %v937, %v936
          %v948 = vpack.c.bf16 %v939, %v938
          %v949 = vpack.c.bf16 %v941, %v940
          %vm950 = vcmask 523264
          %951 = vst.msk [vmem:[#allocation2] sm:$0xff] %vm950, %v942
          %952 = vst.msk [vmem:[#allocation2 + $0x8] sm:$0xff] %vm950, %v943
          %953 = vst.msk [vmem:[#allocation2 + $0x10] sm:$0xff] %vm950, %v944
          %954 = vst.msk [vmem:[#allocation2 + $0x18] sm:$0xff] %vm950, %v945
          %955 = vst.msk [vmem:[#allocation2 + $0x20] sm:$0xff] %vm950, %v946
          %956 = vst.msk [vmem:[#allocation2 + $0x28] sm:$0xff] %vm950, %v947
          %957 = vst.msk [vmem:[#allocation2 + $0x30] sm:$0xff] %vm950, %v948
          %958 = vst.msk [vmem:[#allocation2 + $0x38] sm:$0xff] %vm950, %v949
          %v959 = vld [vmem:[%s6] sm:$0x3]
          %v961 = vlaneseq
          %v962 = vshrl.u32 %v961, 7
          %v963 = vsub.s32 0, %v962
          %v964 = vrot.slane %v959, %v963
          %v965 = vlaneseq
          %v966 = vshrl.u32 %v965, 7
          %v967 = vsub.s32 1, %v966
          %v968 = vrot.slane %v959, %v967
          %v971 = vadd.f32 %v964, 0.0
          %v972 = vadd.f32 %v968, 0.0
          %v975 = vcombine.low %v971, %v972
          %v977 = vunpack.c.l.s4 1983009808
          %v978 = vunpack.c.0.s8 %v977
          %v979 = vlaneseq
          %v980 = vshrl.u32 %v979, 7
          %v981 = vsub.s32 %v978, %v980
          %v982 = vrot.slane %v975, %v981
          %984 = vst [vmem:[#allocation6] sm:$0xf] %v982
        $region75: #{student_slimmed_fps_forward.3} parent=66 // pred_fallthru
          _
        %v985 = vld [vmem:[#allocation2] sm:$0xff]
        %v986 = vld [vmem:[#allocation2 + $0x8] sm:$0xff]
        %v987 = vld [vmem:[#allocation2 + $0x10] sm:$0xff]
        %v988 = vld [vmem:[#allocation2 + $0x18] sm:$0xff]
        %v989 = vld [vmem:[#allocation2 + $0x20] sm:$0xff]
        %v990 = vld [vmem:[#allocation2 + $0x28] sm:$0xff]
        %v991 = vld [vmem:[#allocation2 + $0x30] sm:$0xff]
        %v992 = vld [vmem:[#allocation2 + $0x38] sm:$0xff]
        %v993 = vld [vmem:[%s344] sm:$0xff]
        %v994 = vld [vmem:[%s344 + $0x8] sm:$0xff]
        %v995 = vld [vmem:[%s344 + $0x10] sm:$0xff]
        %v996 = vld [vmem:[%s344 + $0x18] sm:$0xff]
        %v997 = vld [vmem:[%s344 + $0x20] sm:$0xff]
        %v998 = vld [vmem:[%s344 + $0x28] sm:$0xff]
        %v999 = vld [vmem:[%s344 + $0x30] sm:$0xff]
        %v1000 = vld [vmem:[%s344 + $0x38] sm:$0xff]
        %v1001 = vld [vmem:[%s344 + $0x40] sm:$0xff]
        %v1002 = vld [vmem:[%s344 + $0x48] sm:$0xff]
        %v1003 = vld [vmem:[%s344 + $0x50] sm:$0xff]
        %v1004 = vld [vmem:[%s344 + $0x58] sm:$0xff]
        %v1005 = vld [vmem:[%s344 + $0x60] sm:$0xff]
        %v1006 = vld [vmem:[%s344 + $0x68] sm:$0xff]
        %v1007 = vld [vmem:[%s344 + $0x70] sm:$0xff]
        %v1008 = vld [vmem:[%s344 + $0x78] sm:$0xff]
        %v1009 = vld [vmem:[%s389] sm:$0xf]
        %v1011 = vlaneseq
        %v1012 = vshrl.u32 %v1011, 7
        %v1013 = vsub.s32 0, %v1012
        %v1014 = vrot.slane %v1009, %v1013
        %v1015 = vlaneseq
        %v1016 = vshrl.u32 %v1015, 7
        %v1017 = vsub.s32 1, %v1016
        %v1018 = vrot.slane %v1009, %v1017
        %v1019 = vlaneseq
        %v1020 = vshrl.u32 %v1019, 7
        %v1021 = vsub.s32 2, %v1020
        %v1022 = vrot.slane %v1009, %v1021
        %v1023 = vlaneseq
        %v1024 = vshrl.u32 %v1023, 7
        %v1025 = vsub.s32 3, %v1024
        %v1026 = vrot.slane %v1009, %v1025
        %v1047 = vunpack.c.l.b16 %v993
        %v1048 = vunpack.c.h.b16 %v993
        %v1049 = vunpack.c.l.b16 %v994
        %v1050 = vunpack.c.h.b16 %v994
        %v1051 = vunpack.c.l.b16 %v995
        %v1052 = vunpack.c.h.b16 %v995
        %v1053 = vunpack.c.l.b16 %v996
        %v1054 = vunpack.c.h.b16 %v996
        %v1055 = vunpack.c.l.b16 %v997
        %v1056 = vunpack.c.h.b16 %v997
        %v1057 = vunpack.c.l.b16 %v998
        %v1058 = vunpack.c.h.b16 %v998
        %v1059 = vunpack.c.l.b16 %v999
        %v1060 = vunpack.c.h.b16 %v999
        %v1061 = vunpack.c.l.b16 %v1000
        %v1062 = vunpack.c.h.b16 %v1000
        %v1063 = vunpack.c.l.b16 %v1001
        %v1064 = vunpack.c.h.b16 %v1001
        %v1065 = vunpack.c.l.b16 %v1002
        %v1066 = vunpack.c.h.b16 %v1002
        %v1067 = vunpack.c.l.b16 %v1003
        %v1068 = vunpack.c.h.b16 %v1003
        %v1069 = vunpack.c.l.b16 %v1004
        %v1070 = vunpack.c.h.b16 %v1004
        %v1071 = vunpack.c.l.b16 %v1005
        %v1072 = vunpack.c.h.b16 %v1005
        %v1073 = vunpack.c.l.b16 %v1006
        %v1074 = vunpack.c.h.b16 %v1006
        %v1075 = vunpack.c.l.b16 %v1007
        %v1076 = vunpack.c.h.b16 %v1007
        %v1077 = vunpack.c.l.b16 %v1008
        %v1078 = vunpack.c.h.b16 %v1008
        %v1079 = vpack.c.b16 %v1051, %v1047
        %v1080 = vpack.c.b16 %v1052, %v1048
        %v1081 = vpack.c.b16 %v1053, %v1049
        %v1082 = vpack.c.b16 %v1054, %v1050
        %v1083 = vpack.c.b16 %v1059, %v1055
        %v1084 = vpack.c.b16 %v1060, %v1056
        %v1085 = vpack.c.b16 %v1061, %v1057
        %v1086 = vpack.c.b16 %v1062, %v1058
        %v1087 = vpack.c.b16 %v1067, %v1063
        %v1088 = vpack.c.b16 %v1068, %v1064
        %v1089 = vpack.c.b16 %v1069, %v1065
        %v1090 = vpack.c.b16 %v1070, %v1066
        %v1091 = vpack.c.b16 %v1075, %v1071
        %v1092 = vpack.c.b16 %v1076, %v1072
        %v1093 = vpack.c.b16 %v1077, %v1073
        %v1094 = vpack.c.b16 %v1078, %v1074
        %vm1111 = vcmask 523264
        %v1113 = vsel %vm1111, %v985, 0
        %v1116 = vsel %vm1111, %v986, 0
        %v1119 = vsel %vm1111, %v987, 0
        %v1122 = vsel %vm1111, %v988, 0
        %v1125 = vsel %vm1111, %v989, 0
        %v1128 = vsel %vm1111, %v990, 0
        %v1131 = vsel %vm1111, %v991, 0
        %v1134 = vsel %vm1111, %v992, 0
        %1136 = vmatprep.subr.bf16.mxu0 %v1080
        %1137 = vmatpush1.bf16.msra.mxu0 %v1079
        %1138 = vmatprep.subr.bf16.mxu0 %v1084
        %1139 = vmatpush1.bf16.msra.mxu0 %v1083
        %1140 = vmatprep.subr.bf16.mxu0 %v1088
        %1141 = vmatpush1.bf16.msra.mxu0 %v1087
        %1142 = vmatprep.subr.bf16.mxu0 %v1092
        %1143 = vmatpush1.bf16.msra.mxu0 %v1091
        %1144 = vmatprep.subr.bf16.mxu0 0
        %1145 = vmatpush1.bf16.msra.mxu0 0
        %1146 = vmatprep.subr.bf16.mxu0 0
        %1147 = vmatpush1.bf16.msra.mxu0 0
        %1148 = vmatprep.subr.bf16.mxu0 0
        %1149 = vmatpush1.bf16.msra.mxu0 0
        %1150 = vmatprep.subr.bf16.mxu0 0
        %1151 = vmatpush1.bf16.msra.mxu0 0
        %1152 = vmatprep.subr.bf16.mxu0 0
        %1153 = vmatpush1.bf16.msra.mxu0 0
        %1154 = vmatprep.subr.bf16.mxu0 0
        %1155 = vmatpush1.bf16.msra.mxu0 0
        %1156 = vmatprep.subr.bf16.mxu0 0
        %1157 = vmatpush1.bf16.msra.mxu0 0
        %1158 = vmatprep.subr.bf16.mxu0 0
        %1159 = vmatpush1.bf16.msra.mxu0 0
        %1160 = vmatprep.subr.bf16.mxu0 0
        %1161 = vmatpush1.bf16.msra.mxu0 0
        %1162 = vmatprep.subr.bf16.mxu0 0
        %1163 = vmatpush1.bf16.msra.mxu0 0
        %1164 = vmatprep.subr.bf16.mxu0 0
        %1165 = vmatpush1.bf16.msra.mxu0 0
        %1166 = vmatprep.subr.bf16.mxu0 0
        %1167 = vmatpush1.bf16.msra.mxu0 0
        %1168 = vmatprep.mubr.bf16.mxu0 0
        %1169 = vmatmul.mubr.bf16.gmra.mrb[0].mxu0 %v1113
        %v1170 = vpop.f32.mrb[0].mxu0
        %v1171 = vadd.f32 %v1014, %v1170
        %v1172 = vpop.f32.mrb[0].mxu0
        %v1173 = vadd.f32 %v1018, %v1172
        %v1174 = vpop.f32.mrb[0].mxu0
        %v1175 = vadd.f32 %v1014, %v1174
        %v1176 = vpop.f32.mrb[0].mxu0
        %v1177 = vadd.f32 %v1018, %v1176
        %1178 = vmatprep.mubr.bf16.mxu0 0
        %1179 = vmatmul.mubr.bf16.gmra.mrb[0].mxu0 %v1116
        %v1180 = vpop.f32.mrb[0].mxu0
        %v1181 = vadd.f32 %v1014, %v1180
        %v1182 = vpop.f32.mrb[0].mxu0
        %v1183 = vadd.f32 %v1018, %v1182
        %v1184 = vpop.f32.mrb[0].mxu0
        %v1185 = vadd.f32 %v1014, %v1184
        %v1186 = vpop.f32.mrb[0].mxu0
        %v1187 = vadd.f32 %v1018, %v1186
        %1188 = vmatprep.mubr.bf16.mxu0 0
        %1189 = vmatmul.mubr.bf16.gmra.mrb[0].mxu0 %v1119
        %v1190 = vpop.f32.mrb[0].mxu0
        %v1191 = vadd.f32 %v1014, %v1190
        %v1192 = vpop.f32.mrb[0].mxu0
        %v1193 = vadd.f32 %v1018, %v1192
        %v1194 = vpop.f32.mrb[0].mxu0
        %v1195 = vadd.f32 %v1014, %v1194
        %v1196 = vpop.f32.mrb[0].mxu0
        %v1197 = vadd.f32 %v1018, %v1196
        %1198 = vmatprep.mubr.bf16.mxu0 0
        %1199 = vmatmul.mubr.bf16.gmra.mrb[0].mxu0 %v1122
        %v1200 = vpop.f32.mrb[0].mxu0
        %v1201 = vadd.f32 %v1014, %v1200
        %v1202 = vpop.f32.mrb[0].mxu0
        %v1203 = vadd.f32 %v1018, %v1202
        %v1204 = vpop.f32.mrb[0].mxu0
        %v1205 = vadd.f32 %v1014, %v1204
        %v1206 = vpop.f32.mrb[0].mxu0
        %v1207 = vadd.f32 %v1018, %v1206
        %1208 = vmatprep.mubr.bf16.mxu0 0
        %1209 = vmatmul.mubr.bf16.gmra.mrb[0].mxu0 %v1125
        %v1210 = vpop.f32.mrb[0].mxu0
        %v1211 = vadd.f32 %v1014, %v1210
        %v1212 = vpop.f32.mrb[0].mxu0
        %v1213 = vadd.f32 %v1018, %v1212
        %v1214 = vpop.f32.mrb[0].mxu0
        %v1215 = vadd.f32 %v1014, %v1214
        %v1216 = vpop.f32.mrb[0].mxu0
        %v1217 = vadd.f32 %v1018, %v1216
        %1218 = vmatprep.mubr.bf16.mxu0 0
        %1219 = vmatmul.mubr.bf16.gmra.mrb[0].mxu0 %v1128
        %v1220 = vpop.f32.mrb[0].mxu0
        %v1221 = vadd.f32 %v1014, %v1220
        %v1222 = vpop.f32.mrb[0].mxu0
        %v1223 = vadd.f32 %v1018, %v1222
        %v1224 = vpop.f32.mrb[0].mxu0
        %v1225 = vadd.f32 %v1014, %v1224
        %v1226 = vpop.f32.mrb[0].mxu0
        %v1227 = vadd.f32 %v1018, %v1226
        %1228 = vmatprep.mubr.bf16.mxu0 0
        %1229 = vmatmul.mubr.bf16.gmra.mrb[0].mxu0 %v1131
        %v1230 = vpop.f32.mrb[0].mxu0
        %v1231 = vadd.f32 %v1014, %v1230
        %v1232 = vpop.f32.mrb[0].mxu0
        %v1233 = vadd.f32 %v1018, %v1232
        %v1234 = vpop.f32.mrb[0].mxu0
        %v1235 = vadd.f32 %v1014, %v1234
        %v1236 = vpop.f32.mrb[0].mxu0
        %v1237 = vadd.f32 %v1018, %v1236
        %1238 = vmatprep.mubr.bf16.mxu0 0
        %1239 = vmatmul.mubr.bf16.gmra.mrb[0].mxu0 %v1134
        %v1240 = vpop.f32.mrb[0].mxu0
        %v1241 = vadd.f32 %v1014, %v1240
        %v1242 = vpop.f32.mrb[0].mxu0
        %v1243 = vadd.f32 %v1018, %v1242
        %v1244 = vpop.f32.mrb[0].mxu0
        %v1245 = vadd.f32 %v1014, %v1244
        %v1246 = vpop.f32.mrb[0].mxu0
        %v1247 = vadd.f32 %v1018, %v1246
        %1248 = vdwg.mxu0
        %1249 = vmatprep.subr.bf16.mxu0 %v1082
        %1250 = vmatpush1.bf16.msra.mxu0 %v1081
        %1251 = vmatprep.subr.bf16.mxu0 %v1086
        %1252 = vmatpush1.bf16.msra.mxu0 %v1085
        %1253 = vmatprep.subr.bf16.mxu0 %v1090
        %1254 = vmatpush1.bf16.msra.mxu0 %v1089
        %1255 = vmatprep.subr.bf16.mxu0 %v1094
        %1256 = vmatpush1.bf16.msra.mxu0 %v1093
        %1257 = vmatprep.subr.bf16.mxu0 0
        %1258 = vmatpush1.bf16.msra.mxu0 0
        %1259 = vmatprep.subr.bf16.mxu0 0
        %1260 = vmatpush1.bf16.msra.mxu0 0
        %1261 = vmatprep.subr.bf16.mxu0 0
        %1262 = vmatpush1.bf16.msra.mxu0 0
        %1263 = vmatprep.subr.bf16.mxu0 0
        %1264 = vmatpush1.bf16.msra.mxu0 0
        %1265 = vmatprep.subr.bf16.mxu0 0
        %1266 = vmatpush1.bf16.msra.mxu0 0
        %1267 = vmatprep.subr.bf16.mxu0 0
        %1268 = vmatpush1.bf16.msra.mxu0 0
        %1269 = vmatprep.subr.bf16.mxu0 0
        %1270 = vmatpush1.bf16.msra.mxu0 0
        %1271 = vmatprep.subr.bf16.mxu0 0
        %1272 = vmatpush1.bf16.msra.mxu0 0
        %1273 = vmatprep.subr.bf16.mxu0 0
        %1274 = vmatpush1.bf16.msra.mxu0 0
        %1275 = vmatprep.subr.bf16.mxu0 0
        %1276 = vmatpush1.bf16.msra.mxu0 0
        %1277 = vmatprep.subr.bf16.mxu0 0
        %1278 = vmatpush1.bf16.msra.mxu0 0
        %1279 = vmatprep.subr.bf16.mxu0 0
        %1280 = vmatpush1.bf16.msra.mxu0 0
        %1281 = vmatprep.mubr.bf16.mxu0 0
        %1282 = vmatmul.mubr.bf16.gmra.mrb[0].mxu0 %v1113
        %v1283 = vpop.f32.mrb[0].mxu0
        %v1284 = vadd.f32 %v1022, %v1283
        %v1285 = vpop.f32.mrb[0].mxu0
        %v1286 = vadd.f32 %v1026, %v1285
        %v1287 = vpop.f32.mrb[0].mxu0
        %v1288 = vadd.f32 %v1022, %v1287
        %v1289 = vpop.f32.mrb[0].mxu0
        %v1290 = vadd.f32 %v1026, %v1289
        %1291 = vmatprep.mubr.bf16.mxu0 0
        %1292 = vmatmul.mubr.bf16.gmra.mrb[0].mxu0 %v1116
        %v1293 = vpop.f32.mrb[0].mxu0
        %v1294 = vadd.f32 %v1022, %v1293
        %v1295 = vpop.f32.mrb[0].mxu0
        %v1296 = vadd.f32 %v1026, %v1295
        %v1297 = vpop.f32.mrb[0].mxu0
        %v1298 = vadd.f32 %v1022, %v1297
        %v1299 = vpop.f32.mrb[0].mxu0
        %v1300 = vadd.f32 %v1026, %v1299
        %1301 = vmatprep.mubr.bf16.mxu0 0
        %1302 = vmatmul.mubr.bf16.gmra.mrb[0].mxu0 %v1119
        %v1303 = vpop.f32.mrb[0].mxu0
        %v1304 = vadd.f32 %v1022, %v1303
        %v1305 = vpop.f32.mrb[0].mxu0
        %v1306 = vadd.f32 %v1026, %v1305
        %v1307 = vpop.f32.mrb[0].mxu0
        %v1308 = vadd.f32 %v1022, %v1307
        %v1309 = vpop.f32.mrb[0].mxu0
        %v1310 = vadd.f32 %v1026, %v1309
        %1311 = vmatprep.mubr.bf16.mxu0 0
        %1312 = vmatmul.mubr.bf16.gmra.mrb[0].mxu0 %v1122
        %v1313 = vpop.f32.mrb[0].mxu0
        %v1314 = vadd.f32 %v1022, %v1313
        %v1315 = vpop.f32.mrb[0].mxu0
        %v1316 = vadd.f32 %v1026, %v1315
        %v1317 = vpop.f32.mrb[0].mxu0
        %v1318 = vadd.f32 %v1022, %v1317
        %v1319 = vpop.f32.mrb[0].mxu0
        %v1320 = vadd.f32 %v1026, %v1319
        %1321 = vmatprep.mubr.bf16.mxu0 0
        %1322 = vmatmul.mubr.bf16.gmra.mrb[0].mxu0 %v1125
        %v1323 = vpop.f32.mrb[0].mxu0
        %v1324 = vadd.f32 %v1022, %v1323
        %v1325 = vpop.f32.mrb[0].mxu0
        %v1326 = vadd.f32 %v1026, %v1325
        %v1327 = vpop.f32.mrb[0].mxu0
        %v1328 = vadd.f32 %v1022, %v1327
        %v1329 = vpop.f32.mrb[0].mxu0
        %v1330 = vadd.f32 %v1026, %v1329
        %1331 = vmatprep.mubr.bf16.mxu0 0
        %1332 = vmatmul.mubr.bf16.gmra.mrb[0].mxu0 %v1128
        %v1333 = vpop.f32.mrb[0].mxu0
        %v1334 = vadd.f32 %v1022, %v1333
        %v1335 = vpop.f32.mrb[0].mxu0
        %v1336 = vadd.f32 %v1026, %v1335
        %v1337 = vpop.f32.mrb[0].mxu0
        %v1338 = vadd.f32 %v1022, %v1337
        %v1339 = vpop.f32.mrb[0].mxu0
        %v1340 = vadd.f32 %v1026, %v1339
        %1341 = vmatprep.mubr.bf16.mxu0 0
        %1342 = vmatmul.mubr.bf16.gmra.mrb[0].mxu0 %v1131
        %v1343 = vpop.f32.mrb[0].mxu0
        %v1344 = vadd.f32 %v1022, %v1343
        %v1345 = vpop.f32.mrb[0].mxu0
        %v1346 = vadd.f32 %v1026, %v1345
        %v1347 = vpop.f32.mrb[0].mxu0
        %v1348 = vadd.f32 %v1022, %v1347
        %v1349 = vpop.f32.mrb[0].mxu0
        %v1350 = vadd.f32 %v1026, %v1349
        %1351 = vmatprep.mubr.bf16.mxu0 0
        %1352 = vmatmul.mubr.bf16.gmra.mrb[0].mxu0 %v1134
        %v1353 = vpop.f32.mrb[0].mxu0
        %v1354 = vadd.f32 %v1022, %v1353
        %v1355 = vpop.f32.mrb[0].mxu0
        %v1356 = vadd.f32 %v1026, %v1355
        %v1357 = vpop.f32.mrb[0].mxu0
        %v1358 = vadd.f32 %v1022, %v1357
        %v1359 = vpop.f32.mrb[0].mxu0
        %v1360 = vadd.f32 %v1026, %v1359
        %1361 = vdwg.mxu0
        %v1362 = vmax.f32 %v1171, 0.0
        %v1363 = vmax.f32 %v1173, 0.0
        %v1364 = vmax.f32 %v1284, 0.0
        %v1365 = vmax.f32 %v1286, 0.0
        %v1366 = vmax.f32 %v1175, 0.0
        %v1367 = vmax.f32 %v1177, 0.0
        %v1368 = vmax.f32 %v1288, 0.0
        %v1369 = vmax.f32 %v1290, 0.0
        %v1370 = vmax.f32 %v1181, 0.0
        %v1371 = vmax.f32 %v1183, 0.0
        %v1372 = vmax.f32 %v1294, 0.0
        %v1373 = vmax.f32 %v1296, 0.0
        %v1374 = vmax.f32 %v1185, 0.0
        %v1375 = vmax.f32 %v1187, 0.0
        %v1376 = vmax.f32 %v1298, 0.0
        %v1377 = vmax.f32 %v1300, 0.0
        %v1378 = vmax.f32 %v1191, 0.0
        %v1379 = vmax.f32 %v1193, 0.0
        %v1380 = vmax.f32 %v1304, 0.0
        %v1381 = vmax.f32 %v1306, 0.0
        %v1382 = vmax.f32 %v1195, 0.0
        %v1383 = vmax.f32 %v1197, 0.0
        %v1384 = vmax.f32 %v1308, 0.0
        %v1385 = vmax.f32 %v1310, 0.0
        %v1386 = vmax.f32 %v1201, 0.0
        %v1387 = vmax.f32 %v1203, 0.0
        %v1388 = vmax.f32 %v1314, 0.0
        %v1389 = vmax.f32 %v1316, 0.0
        %v1390 = vmax.f32 %v1205, 0.0
        %v1391 = vmax.f32 %v1207, 0.0
        %v1392 = vmax.f32 %v1318, 0.0
        %v1393 = vmax.f32 %v1320, 0.0
        %v1394 = vmax.f32 %v1211, 0.0
        %v1395 = vmax.f32 %v1213, 0.0
        %v1396 = vmax.f32 %v1324, 0.0
        %v1397 = vmax.f32 %v1326, 0.0
        %v1398 = vmax.f32 %v1215, 0.0
        %v1399 = vmax.f32 %v1217, 0.0
        %v1400 = vmax.f32 %v1328, 0.0
        %v1401 = vmax.f32 %v1330, 0.0
        %v1402 = vmax.f32 %v1221, 0.0
        %v1403 = vmax.f32 %v1223, 0.0
        %v1404 = vmax.f32 %v1334, 0.0
        %v1405 = vmax.f32 %v1336, 0.0
        %v1406 = vmax.f32 %v1225, 0.0
        %v1407 = vmax.f32 %v1227, 0.0
        %v1408 = vmax.f32 %v1338, 0.0
        %v1409 = vmax.f32 %v1340, 0.0
        %v1410 = vmax.f32 %v1231, 0.0
        %v1411 = vmax.f32 %v1233, 0.0
        %v1412 = vmax.f32 %v1344, 0.0
        %v1413 = vmax.f32 %v1346, 0.0
        %v1414 = vmax.f32 %v1235, 0.0
        %v1415 = vmax.f32 %v1237, 0.0
        %v1416 = vmax.f32 %v1348, 0.0
        %v1417 = vmax.f32 %v1350, 0.0
        %v1418 = vmax.f32 %v1241, 0.0
        %v1419 = vmax.f32 %v1243, 0.0
        %v1420 = vmax.f32 %v1354, 0.0
        %v1421 = vmax.f32 %v1356, 0.0
        %v1422 = vmax.f32 %v1245, 0.0
        %v1423 = vmax.f32 %v1247, 0.0
        %v1424 = vmax.f32 %v1358, 0.0
        %v1425 = vmax.f32 %v1360, 0.0
        %1426 = vst [vmem:[%s382] sm:$0xff] %v1362
        %1427 = vst [vmem:[%s382 + $0x8] sm:$0xff] %v1363
        %1428 = vst [vmem:[%s382 + $0x10] sm:$0xff] %v1364
        %1429 = vst [vmem:[%s382 + $0x18] sm:$0xff] %v1365
        %1430 = vst [vmem:[%s382 + $0x20] sm:$0xff] %v1366
        %1431 = vst [vmem:[%s382 + $0x28] sm:$0xff] %v1367
        %1432 = vst [vmem:[%s382 + $0x30] sm:$0xff] %v1368
        %1433 = vst [vmem:[%s382 + $0x38] sm:$0xff] %v1369
        %1434 = vst [vmem:[%s382 + $0x40] sm:$0xff] %v1370
        %1435 = vst [vmem:[%s382 + $0x48] sm:$0xff] %v1371
        %1436 = vst [vmem:[%s382 + $0x50] sm:$0xff] %v1372
        %1437 = vst [vmem:[%s382 + $0x58] sm:$0xff] %v1373
        %1438 = vst [vmem:[%s382 + $0x60] sm:$0xff] %v1374
        %1439 = vst [vmem:[%s382 + $0x68] sm:$0xff] %v1375
        %1440 = vst [vmem:[%s382 + $0x70] sm:$0xff] %v1376
        %1441 = vst [vmem:[%s382 + $0x78] sm:$0xff] %v1377
        %1442 = vst [vmem:[%s382 + $0x80] sm:$0xff] %v1378
        %1443 = vst [vmem:[%s382 + $0x88] sm:$0xff] %v1379
        %1444 = vst [vmem:[%s382 + $0x90] sm:$0xff] %v1380
        %1445 = vst [vmem:[%s382 + $0x98] sm:$0xff] %v1381
        %1446 = vst [vmem:[%s382 + $0xa0] sm:$0xff] %v1382
        %1447 = vst [vmem:[%s382 + $0xa8] sm:$0xff] %v1383
        %1448 = vst [vmem:[%s382 + $0xb0] sm:$0xff] %v1384
        %1449 = vst [vmem:[%s382 + $0xb8] sm:$0xff] %v1385
        %1450 = vst [vmem:[%s382 + $0xc0] sm:$0xff] %v1386
        %1451 = vst [vmem:[%s382 + $0xc8] sm:$0xff] %v1387
        %1452 = vst [vmem:[%s382 + $0xd0] sm:$0xff] %v1388
        %1453 = vst [vmem:[%s382 + $0xd8] sm:$0xff] %v1389
        %1454 = vst [vmem:[%s382 + $0xe0] sm:$0xff] %v1390
        %1455 = vst [vmem:[%s382 + $0xe8] sm:$0xff] %v1391
        %1456 = vst [vmem:[%s382 + $0xf0] sm:$0xff] %v1392
        %1457 = vst [vmem:[%s382 + $0xf8] sm:$0xff] %v1393
        %1458 = vst [vmem:[%s382 + $0x100] sm:$0xff] %v1394
        %1459 = vst [vmem:[%s382 + $0x108] sm:$0xff] %v1395
        %1460 = vst [vmem:[%s382 + $0x110] sm:$0xff] %v1396
        %1461 = vst [vmem:[%s382 + $0x118] sm:$0xff] %v1397
        %1462 = vst [vmem:[%s382 + $0x120] sm:$0xff] %v1398
        %1463 = vst [vmem:[%s382 + $0x128] sm:$0xff] %v1399
        %1464 = vst [vmem:[%s382 + $0x130] sm:$0xff] %v1400
        %1465 = vst [vmem:[%s382 + $0x138] sm:$0xff] %v1401
        %1466 = vst [vmem:[%s382 + $0x140] sm:$0xff] %v1402
        %1467 = vst [vmem:[%s382 + $0x148] sm:$0xff] %v1403
        %1468 = vst [vmem:[%s382 + $0x150] sm:$0xff] %v1404
        %1469 = vst [vmem:[%s382 + $0x158] sm:$0xff] %v1405
        %1470 = vst [vmem:[%s382 + $0x160] sm:$0xff] %v1406
        %1471 = vst [vmem:[%s382 + $0x168] sm:$0xff] %v1407
        %1472 = vst [vmem:[%s382 + $0x170] sm:$0xff] %v1408
        %1473 = vst [vmem:[%s382 + $0x178] sm:$0xff] %v1409
        %1474 = vst [vmem:[%s382 + $0x180] sm:$0xff] %v1410
        %1475 = vst [vmem:[%s382 + $0x188] sm:$0xff] %v1411
        %1476 = vst [vmem:[%s382 + $0x190] sm:$0xff] %v1412
        %1477 = vst [vmem:[%s382 + $0x198] sm:$0xff] %v1413
        %1478 = vst [vmem:[%s382 + $0x1a0] sm:$0xff] %v1414
        %1479 = vst [vmem:[%s382 + $0x1a8] sm:$0xff] %v1415
        %1480 = vst [vmem:[%s382 + $0x1b0] sm:$0xff] %v1416
        %1481 = vst [vmem:[%s382 + $0x1b8] sm:$0xff] %v1417
        %1482 = vst [vmem:[%s382 + $0x1c0] sm:$0xff] %v1418
        %1483 = vst [vmem:[%s382 + $0x1c8] sm:$0xff] %v1419
        %1484 = vst [vmem:[%s382 + $0x1d0] sm:$0xff] %v1420
        %1485 = vst [vmem:[%s382 + $0x1d8] sm:$0xff] %v1421
        %1486 = vst [vmem:[%s382 + $0x1e0] sm:$0xff] %v1422
        %1487 = vst [vmem:[%s382 + $0x1e8] sm:$0xff] %v1423
        %1488 = vst [vmem:[%s382 + $0x1f0] sm:$0xff] %v1424
        %1489 = vst [vmem:[%s382 + $0x1f8] sm:$0xff] %v1425
        %v1490 = vadd.f32 %v1362, %v1366
        %v1491 = vadd.f32 %v1490, %v1370
        %v1492 = vadd.f32 %v1491, %v1374
        %v1493 = vadd.f32 %v1492, %v1378
        %v1494 = vadd.f32 %v1493, %v1382
        %v1495 = vadd.f32 %v1494, %v1386
        %v1496 = vadd.f32 %v1495, %v1390
        %v1497 = vrot.slane %v1496, 4
        %v1498 = vadd.f32 %v1496, %v1497
        %v1499 = vrot.slane %v1498, 2
        %v1500 = vadd.f32 %v1498, %v1499
        %v1501 = vrot.slane %v1500, 1
        %v1502 = vadd.f32 %v1500, %v1501
        %v1503 = vadd.f32 %v1363, %v1367
        %v1504 = vadd.f32 %v1503, %v1371
        %v1505 = vadd.f32 %v1504, %v1375
        %v1506 = vadd.f32 %v1505, %v1379
        %v1507 = vadd.f32 %v1506, %v1383
        %v1508 = vadd.f32 %v1507, %v1387
        %v1509 = vadd.f32 %v1508, %v1391
        %v1510 = vrot.slane %v1509, 4
        %v1511 = vadd.f32 %v1509, %v1510
        %v1512 = vrot.slane %v1511, 2
        %v1513 = vadd.f32 %v1511, %v1512
        %v1514 = vrot.slane %v1513, 1
        %v1515 = vadd.f32 %v1513, %v1514
        %v1516 = vadd.f32 %v1364, %v1368
        %v1517 = vadd.f32 %v1516, %v1372
        %v1518 = vadd.f32 %v1517, %v1376
        %v1519 = vadd.f32 %v1518, %v1380
        %v1520 = vadd.f32 %v1519, %v1384
        %v1521 = vadd.f32 %v1520, %v1388
        %v1522 = vadd.f32 %v1521, %v1392
        %v1523 = vrot.slane %v1522, 4
        %v1524 = vadd.f32 %v1522, %v1523
        %v1525 = vrot.slane %v1524, 2
        %v1526 = vadd.f32 %v1524, %v1525
        %v1527 = vrot.slane %v1526, 1
        %v1528 = vadd.f32 %v1526, %v1527
        %v1529 = vadd.f32 %v1365, %v1369
        %v1530 = vadd.f32 %v1529, %v1373
        %v1531 = vadd.f32 %v1530, %v1377
        %v1532 = vadd.f32 %v1531, %v1381
        %v1533 = vadd.f32 %v1532, %v1385
        %v1534 = vadd.f32 %v1533, %v1389
        %v1535 = vadd.f32 %v1534, %v1393
        %v1536 = vrot.slane %v1535, 4
        %v1537 = vadd.f32 %v1535, %v1536
        %v1538 = vrot.slane %v1537, 2
        %v1539 = vadd.f32 %v1537, %v1538
        %v1540 = vrot.slane %v1539, 1
        %v1541 = vadd.f32 %v1539, %v1540
        %v1542 = vrcp.pop 64.0
        %v1543 = vmul.f32 %v1502, %v1542
        %v1544 = vmul.f32 %v1515, %v1542
        %v1545 = vmul.f32 %v1528, %v1542
        %v1546 = vmul.f32 %v1541, %v1542
        %v1547 = vadd.f32 %v1394, %v1398
        %v1548 = vadd.f32 %v1547, %v1402
        %v1549 = vadd.f32 %v1548, %v1406
        %v1550 = vadd.f32 %v1549, %v1410
        %v1551 = vadd.f32 %v1550, %v1414
        %v1552 = vadd.f32 %v1551, %v1418
        %v1553 = vadd.f32 %v1552, %v1422
        %v1554 = vrot.slane %v1553, 4
        %v1555 = vadd.f32 %v1553, %v1554
        %v1556 = vrot.slane %v1555, 2
        %v1557 = vadd.f32 %v1555, %v1556
        %v1558 = vrot.slane %v1557, 1
        %v1559 = vadd.f32 %v1557, %v1558
        %v1560 = vadd.f32 %v1395, %v1399
        %v1561 = vadd.f32 %v1560, %v1403
        %v1562 = vadd.f32 %v1561, %v1407
        %v1563 = vadd.f32 %v1562, %v1411
        %v1564 = vadd.f32 %v1563, %v1415
        %v1565 = vadd.f32 %v1564, %v1419
        %v1566 = vadd.f32 %v1565, %v1423
        %v1567 = vrot.slane %v1566, 4
        %v1568 = vadd.f32 %v1566, %v1567
        %v1569 = vrot.slane %v1568, 2
        %v1570 = vadd.f32 %v1568, %v1569
        %v1571 = vrot.slane %v1570, 1
        %v1572 = vadd.f32 %v1570, %v1571
        %v1573 = vadd.f32 %v1396, %v1400
        %v1574 = vadd.f32 %v1573, %v1404
        %v1575 = vadd.f32 %v1574, %v1408
        %v1576 = vadd.f32 %v1575, %v1412
        %v1577 = vadd.f32 %v1576, %v1416
        %v1578 = vadd.f32 %v1577, %v1420
        %v1579 = vadd.f32 %v1578, %v1424
        %v1580 = vrot.slane %v1579, 4
        %v1581 = vadd.f32 %v1579, %v1580
        %v1582 = vrot.slane %v1581, 2
        %v1583 = vadd.f32 %v1581, %v1582
        %v1584 = vrot.slane %v1583, 1
        %v1585 = vadd.f32 %v1583, %v1584
        %v1586 = vadd.f32 %v1397, %v1401
        %v1587 = vadd.f32 %v1586, %v1405
        %v1588 = vadd.f32 %v1587, %v1409
        %v1589 = vadd.f32 %v1588, %v1413
        %v1590 = vadd.f32 %v1589, %v1417
        %v1591 = vadd.f32 %v1590, %v1421
        %v1592 = vadd.f32 %v1591, %v1425
        %v1593 = vrot.slane %v1592, 4
        %v1594 = vadd.f32 %v1592, %v1593
        %v1595 = vrot.slane %v1594, 2
        %v1596 = vadd.f32 %v1594, %v1595
        %v1597 = vrot.slane %v1596, 1
        %v1598 = vadd.f32 %v1596, %v1597
        %v1599 = vmul.f32 %v1559, %v1542
        %v1600 = vmul.f32 %v1572, %v1542
        %v1601 = vmul.f32 %v1585, %v1542
        %v1602 = vmul.f32 %v1598, %v1542
        %vm1603 = vcmask 1040384
        %v1604 = vsel %vm1603, %v1543, %v1599
        %v1605 = vsel %vm1603, %v1544, %v1600
        %v1606 = vsel %vm1603, %v1545, %v1601
        %v1607 = vsel %vm1603, %v1546, %v1602
        %v1608 = vpack.c.bf16 %v1604, %v1604
        %v1609 = vpack.c.bf16 %v1605, %v1605
        %v1610 = vpack.c.bf16 %v1606, %v1606
        %v1611 = vpack.c.bf16 %v1607, %v1607
        %v1612 = vld [vmem:[#allocation6] sm:$0xf]
        %v1613 = vld [vmem:[%s396] sm:$0xff]
        %v1614 = vld [vmem:[%s396 + $0x8] sm:$0xff]
        %v1615 = vld [vmem:[%s396 + $0x10] sm:$0xff]
        %v1616 = vld [vmem:[%s396 + $0x18] sm:$0xff]
        %v1617 = vld [vmem:[%s396 + $0x20] sm:$0xff]
        %v1618 = vld [vmem:[%s396 + $0x28] sm:$0xff]
        %v1619 = vld [vmem:[%s396 + $0x30] sm:$0xff]
        %v1620 = vld [vmem:[%s396 + $0x38] sm:$0xff]
        %v1621 = vld [vmem:[%s396 + $0x40] sm:$0xff]
        %v1622 = vld [vmem:[%s396 + $0x48] sm:$0xff]
        %v1623 = vld [vmem:[%s396 + $0x50] sm:$0xff]
        %v1624 = vld [vmem:[%s396 + $0x58] sm:$0xff]
        %v1625 = vld [vmem:[%s396 + $0x60] sm:$0xff]
        %v1626 = vld [vmem:[%s396 + $0x68] sm:$0xff]
        %v1627 = vld [vmem:[%s396 + $0x70] sm:$0xff]
        %v1628 = vld [vmem:[%s396 + $0x78] sm:$0xff]
        %v1629 = vld [vmem:[%s396 + $0x80] sm:$0xff]
        %v1630 = vld [vmem:[%s396 + $0x88] sm:$0xff]
        %v1631 = vld [vmem:[%s396 + $0x90] sm:$0xff]
        %v1632 = vld [vmem:[%s396 + $0x98] sm:$0xff]
        %v1633 = vld [vmem:[%s396 + $0xa0] sm:$0xff]
        %v1634 = vld [vmem:[%s396 + $0xa8] sm:$0xff]
        %v1635 = vld [vmem:[%s396 + $0xb0] sm:$0xff]
        %v1636 = vld [vmem:[%s396 + $0xb8] sm:$0xff]
        %v1637 = vld [vmem:[%s396 + $0xc0] sm:$0xff]
        %v1638 = vld [vmem:[%s396 + $0xc8] sm:$0xff]
        %v1639 = vld [vmem:[%s396 + $0xd0] sm:$0xff]
        %v1640 = vld [vmem:[%s396 + $0xd8] sm:$0xff]
        %v1641 = vld [vmem:[%s396 + $0xe0] sm:$0xff]
        %v1642 = vld [vmem:[%s396 + $0xe8] sm:$0xff]
        %v1643 = vld [vmem:[%s396 + $0xf0] sm:$0xff]
        %v1644 = vld [vmem:[%s396 + $0xf8] sm:$0xff]
        %v1645 = vld [vmem:[%s396 + $0x100] sm:$0xff]
        %v1646 = vld [vmem:[%s396 + $0x108] sm:$0xff]
        %v1647 = vld [vmem:[%s396 + $0x110] sm:$0xff]
        %v1648 = vld [vmem:[%s396 + $0x118] sm:$0xff]
        %v1649 = vld [vmem:[%s396 + $0x120] sm:$0xff]
        %v1650 = vld [vmem:[%s396 + $0x128] sm:$0xff]
        %v1651 = vld [vmem:[%s396 + $0x130] sm:$0xff]
        %v1652 = vld [vmem:[%s396 + $0x138] sm:$0xff]
        %v1653 = vld [vmem:[%s396 + $0x140] sm:$0xff]
        %v1654 = vld [vmem:[%s396 + $0x148] sm:$0xff]
        %v1655 = vld [vmem:[%s396 + $0x150] sm:$0xff]
        %v1656 = vld [vmem:[%s396 + $0x158] sm:$0xff]
        %v1657 = vld [vmem:[%s396 + $0x160] sm:$0xff]
        %v1658 = vld [vmem:[%s396 + $0x168] sm:$0xff]
        %v1659 = vld [vmem:[%s396 + $0x170] sm:$0xff]
        %v1660 = vld [vmem:[%s396 + $0x178] sm:$0xff]
        %v1661 = vld [vmem:[%s396 + $0x180] sm:$0xff]
        %v1662 = vld [vmem:[%s396 + $0x188] sm:$0xff]
        %v1663 = vld [vmem:[%s396 + $0x190] sm:$0xff]
        %v1664 = vld [vmem:[%s396 + $0x198] sm:$0xff]
        %v1665 = vld [vmem:[%s396 + $0x1a0] sm:$0xff]
        %v1666 = vld [vmem:[%s396 + $0x1a8] sm:$0xff]
        %v1667 = vld [vmem:[%s396 + $0x1b0] sm:$0xff]
        %v1668 = vld [vmem:[%s396 + $0x1b8] sm:$0xff]
        %v1669 = vld [vmem:[%s396 + $0x1c0] sm:$0xff]
        %v1670 = vld [vmem:[%s396 + $0x1c8] sm:$0xff]
        %v1671 = vld [vmem:[%s396 + $0x1d0] sm:$0xff]
        %v1672 = vld [vmem:[%s396 + $0x1d8] sm:$0xff]
        %v1673 = vld [vmem:[%s396 + $0x1e0] sm:$0xff]
        %v1674 = vld [vmem:[%s396 + $0x1e8] sm:$0xff]
        %v1675 = vld [vmem:[%s396 + $0x1f0] sm:$0xff]
        %v1676 = vld [vmem:[%s396 + $0x1f8] sm:$0xff]
        %v1741 = vunpack.c.l.b16 %v1613
        %v1742 = vunpack.c.h.b16 %v1613
        %v1743 = vunpack.c.l.b16 %v1614
        %v1744 = vunpack.c.h.b16 %v1614
        %v1745 = vunpack.c.l.b16 %v1615
        %v1746 = vunpack.c.h.b16 %v1615
        %v1747 = vunpack.c.l.b16 %v1616
        %v1748 = vunpack.c.h.b16 %v1616
        %v1749 = vunpack.c.l.b16 %v1617
        %v1750 = vunpack.c.h.b16 %v1617
        %v1751 = vunpack.c.l.b16 %v1618
        %v1752 = vunpack.c.h.b16 %v1618
        %v1753 = vunpack.c.l.b16 %v1619
        %v1754 = vunpack.c.h.b16 %v1619
        %v1755 = vunpack.c.l.b16 %v1620
        %v1756 = vunpack.c.h.b16 %v1620
        %v1757 = vunpack.c.l.b16 %v1621
        %v1758 = vunpack.c.h.b16 %v1621
        %v1759 = vunpack.c.l.b16 %v1622
        %v1760 = vunpack.c.h.b16 %v1622
        %v1761 = vunpack.c.l.b16 %v1623
        %v1762 = vunpack.c.h.b16 %v1623
        %v1763 = vunpack.c.l.b16 %v1624
        %v1764 = vunpack.c.h.b16 %v1624
        %v1765 = vunpack.c.l.b16 %v1625
        %v1766 = vunpack.c.h.b16 %v1625
        %v1767 = vunpack.c.l.b16 %v1626
        %v1768 = vunpack.c.h.b16 %v1626
        %v1769 = vunpack.c.l.b16 %v1627
        %v1770 = vunpack.c.h.b16 %v1627
        %v1771 = vunpack.c.l.b16 %v1628
        %v1772 = vunpack.c.h.b16 %v1628
        %v1773 = vunpack.c.l.b16 %v1629
        %v1774 = vunpack.c.h.b16 %v1629
        %v1775 = vunpack.c.l.b16 %v1630
        %v1776 = vunpack.c.h.b16 %v1630
        %v1777 = vunpack.c.l.b16 %v1631
        %v1778 = vunpack.c.h.b16 %v1631
        %v1779 = vunpack.c.l.b16 %v1632
        %v1780 = vunpack.c.h.b16 %v1632
        %v1781 = vunpack.c.l.b16 %v1633
        %v1782 = vunpack.c.h.b16 %v1633
        %v1783 = vunpack.c.l.b16 %v1634
        %v1784 = vunpack.c.h.b16 %v1634
        %v1785 = vunpack.c.l.b16 %v1635
        %v1786 = vunpack.c.h.b16 %v1635
        %v1787 = vunpack.c.l.b16 %v1636
        %v1788 = vunpack.c.h.b16 %v1636
        %v1789 = vunpack.c.l.b16 %v1637
        %v1790 = vunpack.c.h.b16 %v1637
        %v1791 = vunpack.c.l.b16 %v1638
        %v1792 = vunpack.c.h.b16 %v1638
        %v1793 = vunpack.c.l.b16 %v1639
        %v1794 = vunpack.c.h.b16 %v1639
        %v1795 = vunpack.c.l.b16 %v1640
        %v1796 = vunpack.c.h.b16 %v1640
        %v1797 = vunpack.c.l.b16 %v1641
        %v1798 = vunpack.c.h.b16 %v1641
        %v1799 = vunpack.c.l.b16 %v1642
        %v1800 = vunpack.c.h.b16 %v1642
        %v1801 = vunpack.c.l.b16 %v1643
        %v1802 = vunpack.c.h.b16 %v1643
        %v1803 = vunpack.c.l.b16 %v1644
        %v1804 = vunpack.c.h.b16 %v1644
        %v1805 = vunpack.c.l.b16 %v1645
        %v1806 = vunpack.c.h.b16 %v1645
        %v1807 = vunpack.c.l.b16 %v1646
        %v1808 = vunpack.c.h.b16 %v1646
        %v1809 = vunpack.c.l.b16 %v1647
        %v1810 = vunpack.c.h.b16 %v1647
        %v1811 = vunpack.c.l.b16 %v1648
        %v1812 = vunpack.c.h.b16 %v1648
        %v1813 = vunpack.c.l.b16 %v1649
        %v1814 = vunpack.c.h.b16 %v1649
        %v1815 = vunpack.c.l.b16 %v1650
        %v1816 = vunpack.c.h.b16 %v1650
        %v1817 = vunpack.c.l.b16 %v1651
        %v1818 = vunpack.c.h.b16 %v1651
        %v1819 = vunpack.c.l.b16 %v1652
        %v1820 = vunpack.c.h.b16 %v1652
        %v1821 = vunpack.c.l.b16 %v1653
        %v1822 = vunpack.c.h.b16 %v1653
        %v1823 = vunpack.c.l.b16 %v1654
        %v1824 = vunpack.c.h.b16 %v1654
        %v1825 = vunpack.c.l.b16 %v1655
        %v1826 = vunpack.c.h.b16 %v1655
        %v1827 = vunpack.c.l.b16 %v1656
        %v1828 = vunpack.c.h.b16 %v1656
        %v1829 = vunpack.c.l.b16 %v1657
        %v1830 = vunpack.c.h.b16 %v1657
        %v1831 = vunpack.c.l.b16 %v1658
        %v1832 = vunpack.c.h.b16 %v1658
        %v1833 = vunpack.c.l.b16 %v1659
        %v1834 = vunpack.c.h.b16 %v1659
        %v1835 = vunpack.c.l.b16 %v1660
        %v1836 = vunpack.c.h.b16 %v1660
        %v1837 = vunpack.c.l.b16 %v1661
        %v1838 = vunpack.c.h.b16 %v1661
        %v1839 = vunpack.c.l.b16 %v1662
        %v1840 = vunpack.c.h.b16 %v1662
        %v1841 = vunpack.c.l.b16 %v1663
        %v1842 = vunpack.c.h.b16 %v1663
        %v1843 = vunpack.c.l.b16 %v1664
        %v1844 = vunpack.c.h.b16 %v1664
        %v1845 = vunpack.c.l.b16 %v1665
        %v1846 = vunpack.c.h.b16 %v1665
        %v1847 = vunpack.c.l.b16 %v1666
        %v1848 = vunpack.c.h.b16 %v1666
        %v1849 = vunpack.c.l.b16 %v1667
        %v1850 = vunpack.c.h.b16 %v1667
        %v1851 = vunpack.c.l.b16 %v1668
        %v1852 = vunpack.c.h.b16 %v1668
        %v1853 = vunpack.c.l.b16 %v1669
        %v1854 = vunpack.c.h.b16 %v1669
        %v1855 = vunpack.c.l.b16 %v1670
        %v1856 = vunpack.c.h.b16 %v1670
        %v1857 = vunpack.c.l.b16 %v1671
        %v1858 = vunpack.c.h.b16 %v1671
        %v1859 = vunpack.c.l.b16 %v1672
        %v1860 = vunpack.c.h.b16 %v1672
        %v1861 = vunpack.c.l.b16 %v1673
        %v1862 = vunpack.c.h.b16 %v1673
        %v1863 = vunpack.c.l.b16 %v1674
        %v1864 = vunpack.c.h.b16 %v1674
        %v1865 = vunpack.c.l.b16 %v1675
        %v1866 = vunpack.c.h.b16 %v1675
        %v1867 = vunpack.c.l.b16 %v1676
        %v1868 = vunpack.c.h.b16 %v1676
        %v1869 = vpack.c.b16 %v1743, %v1741
        %v1870 = vpack.c.b16 %v1744, %v1742
        %v1871 = vpack.c.b16 %v1747, %v1745
        %v1872 = vpack.c.b16 %v1748, %v1746
        %v1873 = vpack.c.b16 %v1751, %v1749
        %v1874 = vpack.c.b16 %v1752, %v1750
        %v1875 = vpack.c.b16 %v1755, %v1753
        %v1876 = vpack.c.b16 %v1756, %v1754
        %v1877 = vpack.c.b16 %v1759, %v1757
        %v1878 = vpack.c.b16 %v1760, %v1758
        %v1879 = vpack.c.b16 %v1763, %v1761
        %v1880 = vpack.c.b16 %v1764, %v1762
        %v1881 = vpack.c.b16 %v1767, %v1765
        %v1882 = vpack.c.b16 %v1768, %v1766
        %v1883 = vpack.c.b16 %v1771, %v1769
        %v1884 = vpack.c.b16 %v1772, %v1770
        %v1885 = vpack.c.b16 %v1775, %v1773
        %v1886 = vpack.c.b16 %v1776, %v1774
        %v1887 = vpack.c.b16 %v1779, %v1777
        %v1888 = vpack.c.b16 %v1780, %v1778
        %v1889 = vpack.c.b16 %v1783, %v1781
        %v1890 = vpack.c.b16 %v1784, %v1782
        %v1891 = vpack.c.b16 %v1787, %v1785
        %v1892 = vpack.c.b16 %v1788, %v1786
        %v1893 = vpack.c.b16 %v1791, %v1789
        %v1894 = vpack.c.b16 %v1792, %v1790
        %v1895 = vpack.c.b16 %v1795, %v1793
        %v1896 = vpack.c.b16 %v1796, %v1794
        %v1897 = vpack.c.b16 %v1799, %v1797
        %v1898 = vpack.c.b16 %v1800, %v1798
        %v1899 = vpack.c.b16 %v1803, %v1801
        %v1900 = vpack.c.b16 %v1804, %v1802
        %v1901 = vpack.c.b16 %v1807, %v1805
        %v1902 = vpack.c.b16 %v1808, %v1806
        %v1903 = vpack.c.b16 %v1811, %v1809
        %v1904 = vpack.c.b16 %v1812, %v1810
        %v1905 = vpack.c.b16 %v1815, %v1813
        %v1906 = vpack.c.b16 %v1816, %v1814
        %v1907 = vpack.c.b16 %v1819, %v1817
        %v1908 = vpack.c.b16 %v1820, %v1818
        %v1909 = vpack.c.b16 %v1823, %v1821
        %v1910 = vpack.c.b16 %v1824, %v1822
        %v1911 = vpack.c.b16 %v1827, %v1825
        %v1912 = vpack.c.b16 %v1828, %v1826
        %v1913 = vpack.c.b16 %v1831, %v1829
        %v1914 = vpack.c.b16 %v1832, %v1830
        %v1915 = vpack.c.b16 %v1835, %v1833
        %v1916 = vpack.c.b16 %v1836, %v1834
        %v1917 = vpack.c.b16 %v1839, %v1837
        %v1918 = vpack.c.b16 %v1840, %v1838
        %v1919 = vpack.c.b16 %v1843, %v1841
        %v1920 = vpack.c.b16 %v1844, %v1842
        %v1921 = vpack.c.b16 %v1847, %v1845
        %v1922 = vpack.c.b16 %v1848, %v1846
        %v1923 = vpack.c.b16 %v1851, %v1849
        %v1924 = vpack.c.b16 %v1852, %v1850
        %v1925 = vpack.c.b16 %v1855, %v1853
        %v1926 = vpack.c.b16 %v1856, %v1854
        %v1927 = vpack.c.b16 %v1859, %v1857
        %v1928 = vpack.c.b16 %v1860, %v1858
        %v1929 = vpack.c.b16 %v1863, %v1861
        %v1930 = vpack.c.b16 %v1864, %v1862
        %v1931 = vpack.c.b16 %v1867, %v1865
        %v1932 = vpack.c.b16 %v1868, %v1866
        %1997 = vmatprep.subr.bf16.mxu0 %v1870
        %1998 = vmatpush1.bf16.msra.mxu0 %v1869
        %1999 = vmatprep.subr.bf16.mxu0 %v1872
        %2000 = vmatpush1.bf16.msra.mxu0 %v1871
        %2001 = vmatprep.subr.bf16.mxu0 %v1874
        %2002 = vmatpush1.bf16.msra.mxu0 %v1873
        %2003 = vmatprep.subr.bf16.mxu0 %v1876
        %2004 = vmatpush1.bf16.msra.mxu0 %v1875
        %2005 = vmatprep.subr.bf16.mxu0 %v1878
        %2006 = vmatpush1.bf16.msra.mxu0 %v1877
        %2007 = vmatprep.subr.bf16.mxu0 %v1880
        %2008 = vmatpush1.bf16.msra.mxu0 %v1879
        %2009 = vmatprep.subr.bf16.mxu0 %v1882
        %2010 = vmatpush1.bf16.msra.mxu0 %v1881
        %2011 = vmatprep.subr.bf16.mxu0 %v1884
        %2012 = vmatpush1.bf16.msra.mxu0 %v1883
        %2013 = vmatprep.subr.bf16.mxu0 %v1886
        %2014 = vmatpush1.bf16.msra.mxu0 %v1885
        %2015 = vmatprep.subr.bf16.mxu0 %v1888
        %2016 = vmatpush1.bf16.msra.mxu0 %v1887
        %2017 = vmatprep.subr.bf16.mxu0 %v1890
        %2018 = vmatpush1.bf16.msra.mxu0 %v1889
        %2019 = vmatprep.subr.bf16.mxu0 %v1892
        %2020 = vmatpush1.bf16.msra.mxu0 %v1891
        %2021 = vmatprep.subr.bf16.mxu0 %v1894
        %2022 = vmatpush1.bf16.msra.mxu0 %v1893
        %2023 = vmatprep.subr.bf16.mxu0 %v1896
        %2024 = vmatpush1.bf16.msra.mxu0 %v1895
        %2025 = vmatprep.subr.bf16.mxu0 %v1898
        %2026 = vmatpush1.bf16.msra.mxu0 %v1897
        %2027 = vmatprep.subr.bf16.mxu0 %v1900
        %2028 = vmatpush1.bf16.msra.mxu0 %v1899
        %2029 = vmatprep.mubr.bf16.mxu0 %v1609
        %2030 = vmatmul.mubr.bf16.gmra.mrb[0].mxu0 %v1608
        %v2031 = vpop.f32.mrb[0].mxu0
        %v2032 = vadd.f32 0.0, %v2031
        %v2033 = vpop.f32.mrb[0].mxu0
        %v2034 = vadd.f32 0.0, %v2033
        %v2035 = vpop.f32.mrb[0].mxu0
        %v2036 = vpop.f32.mrb[0].mxu0
        %2037 = vdwg.mxu0
        %2038 = vmatprep.subr.bf16.mxu0 %v1902
        %2039 = vmatpush1.bf16.msra.mxu0 %v1901
        %2040 = vmatprep.subr.bf16.mxu0 %v1904
        %2041 = vmatpush1.bf16.msra.mxu0 %v1903
        %2042 = vmatprep.subr.bf16.mxu0 %v1906
        %2043 = vmatpush1.bf16.msra.mxu0 %v1905
        %2044 = vmatprep.subr.bf16.mxu0 %v1908
        %2045 = vmatpush1.bf16.msra.mxu0 %v1907
        %2046 = vmatprep.subr.bf16.mxu0 %v1910
        %2047 = vmatpush1.bf16.msra.mxu0 %v1909
        %2048 = vmatprep.subr.bf16.mxu0 %v1912
        %2049 = vmatpush1.bf16.msra.mxu0 %v1911
        %2050 = vmatprep.subr.bf16.mxu0 %v1914
        %2051 = vmatpush1.bf16.msra.mxu0 %v1913
        %2052 = vmatprep.subr.bf16.mxu0 %v1916
        %2053 = vmatpush1.bf16.msra.mxu0 %v1915
        %2054 = vmatprep.subr.bf16.mxu0 %v1918
        %2055 = vmatpush1.bf16.msra.mxu0 %v1917
        %2056 = vmatprep.subr.bf16.mxu0 %v1920
        %2057 = vmatpush1.bf16.msra.mxu0 %v1919
        %2058 = vmatprep.subr.bf16.mxu0 %v1922
        %2059 = vmatpush1.bf16.msra.mxu0 %v1921
        %2060 = vmatprep.subr.bf16.mxu0 %v1924
        %2061 = vmatpush1.bf16.msra.mxu0 %v1923
        %2062 = vmatprep.subr.bf16.mxu0 %v1926
        %2063 = vmatpush1.bf16.msra.mxu0 %v1925
        %2064 = vmatprep.subr.bf16.mxu0 %v1928
        %2065 = vmatpush1.bf16.msra.mxu0 %v1927
        %2066 = vmatprep.subr.bf16.mxu0 %v1930
        %2067 = vmatpush1.bf16.msra.mxu0 %v1929
        %2068 = vmatprep.subr.bf16.mxu0 %v1932
        %2069 = vmatpush1.bf16.msra.mxu0 %v1931
        %2070 = vmatprep.mubr.bf16.mxu0 %v1611
        %2071 = vmatmul.mubr.bf16.gmra.mrb[0].mxu0 %v1610
        %v2072 = vpop.f32.mrb[0].mxu0
        %v2073 = vadd.f32 %v2032, %v2072
        %v2074 = vpop.f32.mrb[0].mxu0
        %v2075 = vadd.f32 %v2034, %v2074
        %v2076 = vpop.f32.mrb[0].mxu0
        %v2077 = vpop.f32.mrb[0].mxu0
        %2078 = vdwg.mxu0
        %v2081 = vcombine.low %v2073, %v2075
        %v2083 = vunpack.c.l.s4 1983009808
        %v2084 = vunpack.c.0.s8 %v2083
        %v2085 = vlaneseq
        %v2086 = vshrl.u32 %v2085, 7
        %v2087 = vsub.s32 %v2084, %v2086
        %v2088 = vrot.slane %v2081, %v2087
        %v2090 = vadd.f32 %v1612, %v2088
        %2091 = vst [vmem:[#allocation6] sm:$0xf] %v2090
        %s2092 = sand.u32 %s194, 1
        %s2093 = scalar_lea.sflag [#allocation5], %s2092
        %s2094 = sand.u32 %s194, 1
        %s2095 = smul.addr %s2094, 512
        %s2096 = scalar_lea.vmem [#allocation4], %s2095
        // Predicated region
        $region76: #{student_slimmed_fps_forward.3} parent=66 // pred_check
          %p2097 = pneg %p204
        $region77: #{student_slimmed_fps_forward.3} parent=66 // pred_check_branch
          %2099 = sbr.rel (%p2097) target = $region79
        $region78: #{student_slimmed_fps_forward.3} parent=66 // pred_region
          %s2100 = smul.u32 4, %s24
          %s2102 = ssub.s32 8192, 8192
          %2103 = vsyncadd %s2093, %s2102
          %s2104 = smul.addr %s2100, 128
          %s2105 = scalar_lea.hbm %s7, %s2104
          %s2106 = sshll.u32 %s2096, 4
          %s2107 = int_to_ptr.vmem [resolvable:$true] %s2106
          %2112 = dma.vmem_to_hbm [thread:$0]  %s2107, 8192, %s2105, %s2093, 512, 2048, 32
        $region79: #{student_slimmed_fps_forward.3} parent=66 // pred_fallthru
          _
        // Predicated region
        $region80: #{student_slimmed_fps_forward.3} parent=66 // pred_check
          %p2113 = pneg %p225
        $region81: #{student_slimmed_fps_forward.3} parent=66 // pred_check_branch
          %2115 = sbr.rel (%p2113) target = $region83
        $region82: #{student_slimmed_fps_forward.3} parent=66 // pred_region
          %s2117 = ssub.s32 64, 64
          %2118 = vsyncadd [#allocation7], %s2117
          %s2120 = sshll.u32 [#allocation6], 4
          %s2121 = int_to_ptr.vmem [resolvable:$true] %s2120
          %2123 = dma.vmem_to_hbm [thread:$0]  %s2121, 64, %s8, [#allocation7]
        $region83: #{student_slimmed_fps_forward.3} parent=66 // pred_fallthru
          _
        // Predicated region
        $region84: #{student_slimmed_fps_forward.3} parent=66 // pred_check
          %p2124 = pneg %p225
        $region85: #{student_slimmed_fps_forward.3} parent=66 // pred_check_branch
          %2126 = sbr.rel (%p2124) target = $region87
        $region86: #{student_slimmed_fps_forward.3} parent=66 // pred_region
          %2127 = dma.done [#allocation7], 64
        $region87: #{student_slimmed_fps_forward.3} parent=66 // pred_fallthru
          _
      $region67: #{student_slimmed_fps_forward.3} parent=5 // pred_fallthru
        _
      %p2128 = scmp.le.s32.totalorder 2, %s19
      // Predicated region
      $region88: #{student_slimmed_fps_forward.3} parent=5 // pred_check
        %p2129 = pneg %p2128
      $region89: #{student_slimmed_fps_forward.3} parent=5 // pred_check_branch
        %2131 = sbr.rel (%p2129) target = $region91
      $region90: #{student_slimmed_fps_forward.3} parent=5 // pred_region
        %s2132 = ssub.s32 %s19, 2
        // Predicated region
        $region92: #{student_slimmed_fps_forward.3} parent=90 // pred_check
          %p2133 = pneg %p210
        $region93: #{student_slimmed_fps_forward.3} parent=90 // pred_check_branch
          %2135 = sbr.rel (%p2133) target = $region95
        $region94: #{student_slimmed_fps_forward.3} parent=90 // pred_region
          %s2136 = sand.u32 %s195, 1
          %s2137 = scalar_lea.sflag [#allocation5], %s2136
          %s2138 = sand.u32 %s195, 1
          %s2139 = smul.addr %s2138, 512
          %s2140 = scalar_lea.vmem [#allocation4], %s2139
          %2141 = dma.done %s2137, 8192
        $region95: #{student_slimmed_fps_forward.3} parent=90 // pred_fallthru
          _
      $region91: #{student_slimmed_fps_forward.3} parent=5 // pred_fallthru
        _
    $region6: #{student_slimmed_fps_forward.3} parent=1 // loop_footer
      %s23 = sadd.s32 1, %s19
    $region7: #{student_slimmed_fps_forward.3} parent=1 // loop_footer_branch
      %18 = sbr.rel target = $region3
    $region8: #{student_slimmed_fps_forward.3} parent=1 // loop_exit
      _
    %2142 = vsyncpa [#allocation5], 1
    %s2143 = scalar_lea.sflag [#allocation5], 1
    %2144 = vsyncpa %s2143, 1
    %2145 = vsyncpa [#allocation7], 1

</llo_original>
